<compile_context>
chip_gen: v7x
topology: tpu7x:2x2x1
jax: 0.10.0
libtpu: 0.0.40
codegen_flags: <defaults>
</compile_context>

<pallas_src>
import jax
import jax.numpy as jnp
from jax.experimental import pallas as pl
from jax.experimental.pallas import tpu as pltpu


def _round_up(x, m):
    return (x + m - 1) // m * m


def _choose_tile_m(m, cap=1024):
    """Largest multiple-of-8 divisor of m that is <= cap and leaves >= 2 tiles."""
    if m <= 16:
        return m
    limit = min(cap, m // 2)          # >= 2 tiles -> both v7x TensorCores busy
    limit -= limit % 8
    for tm in range(limit, 7, -8):
        if m % tm == 0:
            return tm
    return m                          # fallback: one full-M tile (block == array dim)


def _vmem_limit_bytes(*buf_bytes):
    # Everything is (at most) double buffered by the pipeline; add headroom and
    # clamp to [16 MiB, 64 MiB] (v7x physical VMEM is 64 MiB).
    total = 2 * sum(int(b) for b in buf_bytes) + (4 << 20)
    return int(min(max(total, 16 << 20), 64 << 20))


# ----------------------------------------------------------------------------
# Shared im2col glue (XLA): pad + cast + 16-tap gather for a 4x4 / s2 / p1 conv
# ----------------------------------------------------------------------------
def _im2col(x_nhwc, w_pt):
    N, H, W, Cin = x_nhwc.shape
    assert H % 2 == 0 and W % 2 == 0, "k=4, s=2, p=1 lowering assumes even H, W"
    Cout = int(w_pt.shape[0])
    Ho, Wo = H // 2, W // 2

    Cin_p = _round_up(Cin, 8)                 # K = 16*Cin_p -> multiple of 128
    # Single fused pad: spatial halo + channel pad (and bf16 cast) in one pass.
    xp = jnp.pad(x_nhwc.astype(jnp.bfloat16),
                 ((0, 0), (1, 1), (1, 1), (0, Cin_p - Cin)))
    if Cin_p != Cin:
        w_pt = jnp.pad(w_pt, ((0, 0), (0, Cin_p - Cin), (0, 0), (0, 0)))

    # TODO(synk): this still materializes a 4x-duplicated im2col matrix in HBM.
    patches = [xp[:, kh:kh + 2 * Ho:2, kw:kw + 2 * Wo:2, :]
               for kh in range(4) for kw in range(4)]
    cols = jnp.concatenate(patches, axis=-1)  # (N, Ho, Wo, 16*Cin_p)

    K = 16 * Cin_p
    # torch (Cout, Cin, KH, KW) -> (KH, KW, Cin, Cout) -> (K, Cout), bf16.
    wmat = jnp.transpose(w_pt, (2, 3, 1, 0)).reshape(K, Cout).astype(jnp.bfloat16)
    return cols, wmat, Ho, Wo, K, Cout


# ----------------------------------------------------------------------------
# Kernel A: single-pass matmul (full K) + bias + LeakyReLU(0.2)
# ----------------------------------------------------------------------------
def _matmul_bias_lrelu_kernel(x_ref, w_ref, b_ref, o_ref):
    # x_ref: (TM, K) bf16, w_ref: (K, Cout) bf16 (resident), b_ref: (1, Cout) f32
    y = jnp.dot(x_ref[...], w_ref[...], preferred_element_type=jnp.float32)
    y = y + b_ref[...]
    o_ref[...] = jnp.where(y > 0, y, 0.2 * y).astype(o_ref.dtype)


def conv4x4_s2_lrelu(x_nhwc, w_pt, b):
    """4x4 conv, stride 2, pad 1, + bias + LeakyReLU(0.2). Returns NHWC bf16."""
    N = x_nhwc.shape[0]
    cols, wmat, Ho, Wo, K, Cout = _im2col(x_nhwc, w_pt)
    M = N * Ho * Wo
    x2d = cols.reshape(M, K)                  # no M padding: TM divides M below
    b2d = b.reshape(1, Cout).astype(jnp.float32)

    TM = _choose_tile_m(M)
    grid = (M // TM,)

    vmem = _vmem_limit_bytes(TM * K * 2, TM * Cout * 2, K * Cout * 2, Cout * 4)

    out2d = pl.pallas_call(
        _matmul_bias_lrelu_kernel,
        out_shape=jax.ShapeDtypeStruct((M, Cout), jnp.bfloat16),
        grid=grid,
        in_specs=[
            pl.BlockSpec((TM, K), lambda i: (i, 0)),       # activation tile
            pl.BlockSpec((K, Cout), lambda i: (0, 0)),     # weights (resident)
            pl.BlockSpec((1, Cout), lambda i: (0, 0)),     # bias (resident)
        ],
        out_specs=pl.BlockSpec((TM, Cout), lambda i: (i, 0)),
        compiler_params=pltpu.CompilerParams(
            dimension_semantics=("parallel",),
            vmem_limit_bytes=vmem,
        ),
        cost_estimate=pl.CostEstimate(
            flops=2 * M * K * Cout,
            transcendentals=0,
            bytes_accessed=M * K * 2 + K * Cout * 2 + M * Cout * 2 + Cout * 4),
    )(x2d, wmat, b2d)

    return out2d.reshape(N, Ho, Wo, Cout)


# ----------------------------------------------------------------------------
# Kernel B: layer-4 conv + LeakyReLU + global max-pool + FC(C,1) + Sigmoid,
# all fused; the conv4 activation never touches HBM.
# ----------------------------------------------------------------------------
def _conv_lrelu_gmaxpool_fc_sigmoid_kernel(x_ref, w_ref, b_ref, fcw_ref, fcb_ref,
                                           maps_ref, out_ref):
    # x_ref:   (1, THW, K) bf16          w_ref: (K, Cout) bf16 (resident)
    # b_ref:   (1, Cout) f32             fcw_ref: (1, Cout) f32, fcb_ref: (1, 1) f32
    # maps_ref:(1, 1, Cout) f32 (resident across the spatial-tile axis)
    # out_ref: (1, 1, 1) f32
    t = pl.program_id(1)

    y = jnp.dot(x_ref[0], w_ref[...], preferred_element_type=jnp.float32)
    y = y + b_ref[...]
    y = jnp.where(y > 0, y, 0.2 * y)                     # LeakyReLU(0.2)
    tile_max = jnp.max(y, axis=0, keepdims=True)         # (1, Cout) channel max

    @pl.when(t == 0)
    def _():
        maps_ref[0] = tile_max

    @pl.when(t > 0)
    def _():
        maps_ref[0] = jnp.maximum(maps_ref[0], tile_max)

    @pl.when(t == pl.num_programs(1) - 1)
    def _():
        m = maps_ref[0]                                   # (1, Cout) f32
        # FC(C -> 1): lane-wise multiply + cross-lane reduce (VPU/XLU); a 1-wide
        # MXU matmul would be pure warm-up/drain overhead.
        logit = jnp.sum(m * fcw_ref[...], axis=-1, keepdims=True) + fcb_ref[...]
        out_ref[0] = jax.nn.sigmoid(logit)


def conv4_maxpool_fc_sigmoid(x_nhwc, w_pt, b, fc_w, fc_b):
    N = x_nhwc.shape[0]
    cols, wmat, Ho, Wo, K, Cout = _im2col(x_nhwc, w_pt)
    HW = Ho * Wo
    x3d = cols.reshape(N, HW, K)

    # Spatial tile must divide HW exactly (padded rows would corrupt the max).
    THW = HW if HW <= 2048 else _choose_tile_m(HW, cap=2048)
    T = HW // THW
    grid = (N, T)

    b2d = b.reshape(1, Cout).astype(jnp.float32)
    fcw = fc_w.reshape(1, Cout).astype(jnp.float32)
    fcb = fc_b.reshape(1, 1).astype(jnp.float32)

    vmem = _vmem_limit_bytes(THW * K * 2, K * Cout * 2, 3 * Cout * 4, 16)

    maps, out = pl.pallas_call(
        _conv_lrelu_gmaxpool_fc_sigmoid_kernel,
        out_shape=(jax.ShapeDtypeStruct((N, 1, Cout), jnp.float32),
                   jax.ShapeDtypeStruct((N, 1, 1), jnp.float32)),
        grid=grid,
        in_specs=[
            pl.BlockSpec((1, THW, K), lambda n, t: (n, t, 0)),  # im2col tile
            pl.BlockSpec((K, Cout), lambda n, t: (0, 0)),       # conv weights
            pl.BlockSpec((1, Cout), lambda n, t: (0, 0)),       # conv bias
            pl.BlockSpec((1, Cout), lambda n, t: (0, 0)),       # fc weight
            pl.BlockSpec((1, 1), lambda n, t: (0, 0)),          # fc bias
        ],
        out_specs=(pl.BlockSpec((1, 1, Cout), lambda n, t: (n, 0, 0)),
                   pl.BlockSpec((1, 1, 1), lambda n, t: (n, 0, 0))),
        compiler_params=pltpu.CompilerParams(
            dimension_semantics=("parallel", "arbitrary"),
            vmem_limit_bytes=vmem,
        ),
        cost_estimate=pl.CostEstimate(
            flops=2 * N * HW * K * Cout + 2 * N * Cout,
            transcendentals=N,
            bytes_accessed=(N * HW * K * 2 + K * Cout * 2 + (2 + N) * Cout * 4
                            + (N + 1) * 4)),
    )(x3d, wmat, b2d, fcw, fcb)

    return out.reshape(N, 1), maps.reshape(N, Cout, 1, 1)


# ----------------------------------------------------------------------------
# Params + full module forward
# ----------------------------------------------------------------------------
def init_params(key, ndf=16):
    ks = jax.random.split(key, 10)

    def conv_w(k, cout, cin):
        return 0.05 * jax.random.normal(k, (cout, cin, 4, 4), jnp.float32)

    return {
        "w1": conv_w(ks[0], ndf, 6),           "b1": 0.01 * jax.random.normal(ks[1], (ndf,), jnp.float32),
        "w2": conv_w(ks[2], ndf * 2, ndf),     "b2": 0.01 * jax.random.normal(ks[3], (ndf * 2,), jnp.float32),
        "w3": conv_w(ks[4], ndf * 4, ndf * 2), "b3": 0.01 * jax.random.normal(ks[5], (ndf * 4,), jnp.float32),
        "w4": conv_w(ks[6], ndf * 8, ndf * 4), "b4": 0.01 * jax.random.normal(ks[7], (ndf * 8,), jnp.float32),
        "fc_w": 0.05 * jax.random.normal(ks[8], (1, ndf * 8), jnp.float32),
        "fc_b": 0.01 * jax.random.normal(ks[9], (1,), jnp.float32),
    }


@jax.jit
def s4gan_discriminator_forward(params, x_nchw):
    # NCHW (PyTorch) -> NHWC (kernel layout)
    x = jnp.transpose(x_nchw, (0, 2, 3, 1))
    # TODO(synk): nn.Dropout2d(0.5) is treated as identity (eval-mode forward).
    x = conv4x4_s2_lrelu(x, params["w1"], params["b1"])
    x = conv4x4_s2_lrelu(x, params["w2"], params["b2"])
    x = conv4x4_s2_lrelu(x, params["w3"], params["b3"])
    out, conv4_maps = conv4_maxpool_fc_sigmoid(
        x, params["w4"], params["b4"], params["fc_w"], params["fc_b"])
    # conv4_maps: (N, ndf*8, 1, 1), matching AdaptiveMaxPool2d(1) in NCHW.
    return out, conv4_maps


if __name__ == "__main__":
    key = jax.random.PRNGKey(0)
    k_param, k_x = jax.random.split(key)

    ndf = 16
    N, C_in, H, W = 2, 6, 32, 32           # small, consistent with conv1(6, ndf, 4, 2, 1)
    params = init_params(k_param, ndf=ndf)
    x = jax.random.normal(k_x, (N, C_in, H, W), jnp.float32)

    out, conv4_maps = s4gan_discriminator_forward(params, x)
    out = jax.block_until_ready(out)
    conv4_maps = jax.block_until_ready(conv4_maps)

    assert out.shape == (N, 1)
    assert conv4_maps.shape == (N, ndf * 8, 1, 1)
    assert bool(jnp.all(jnp.isfinite(out)))
    assert bool(jnp.all((out >= 0.0) & (out <= 1.0)))
    assert bool(jnp.all(jnp.isfinite(conv4_maps)))
    print("KERNEL_OK")
</pallas_src>

<mosaic_0001>
module attributes {stable_mosaic.version = 11 : i64} {
  func.func @_matmul_bias_lrelu_kernel(%arg0: i32, %arg1: memref<256x128xbf16, #tpu.memory_space<vmem>>, %arg2: memref<128x16xbf16, #tpu.memory_space<vmem>>, %arg3: memref<1x16xf32, #tpu.memory_space<vmem>>, %arg4: memref<256x16xbf16, #tpu.memory_space<vmem>>) attributes {dimension_semantics = [#tpu.dimension_semantics<parallel>], iteration_bounds = array<i64: 2>, scalar_prefetch = 0 : i64, scratch_operands = 0 : i64, tpu.core_type = #tpu.core_type<tc>, window_params = [{transform_indices = @transform_0, window_bounds = array<i64: 256, 128>}, {pipeline_mode = #tpu.pipeline_mode<synchronous>, transform_indices = @transform_1, window_bounds = array<i64: 128, 16>}, {pipeline_mode = #tpu.pipeline_mode<synchronous>, transform_indices = @transform_2, window_bounds = array<i64: 1, 16>}, {transform_indices = @transform_3, window_bounds = array<i64: 256, 16>}]} {
    %c0 = arith.constant 0 : index
    %c0_0 = arith.constant 0 : index
    %0 = vector.load %arg1[%c0, %c0_0] : memref<256x128xbf16, #tpu.memory_space<vmem>>, vector<256x128xbf16>
    %c0_1 = arith.constant 0 : index
    %c0_2 = arith.constant 0 : index
    %1 = vector.load %arg2[%c0_1, %c0_2] : memref<128x16xbf16, #tpu.memory_space<vmem>>, vector<128x16xbf16>
    %cst = arith.constant dense<0.000000e+00> : vector<256x16xf32>
    %2 = tpu.matmul %0, %1, %cst {dimension_numbers = #tpu.dot_dimension_numbers<[1], [0], [0], [1], [0, 0, 1, 1], [], []>} : vector<256x128xbf16>, vector<128x16xbf16>, vector<256x16xf32> -> vector<256x16xf32>
    %c0_3 = arith.constant 0 : index
    %c0_4 = arith.constant 0 : index
    %3 = vector.load %arg3[%c0_3, %c0_4] : memref<1x16xf32, #tpu.memory_space<vmem>>, vector<1x16xf32>
    %4 = vector.broadcast %3 : vector<1x16xf32> to vector<256x16xf32>
    %5 = arith.addf %2, %4 : vector<256x16xf32>
    %cst_5 = arith.constant 0.000000e+00 : f32
    %6 = vector.broadcast %cst_5 : f32 to vector<256x16xf32>
    %7 = arith.cmpf ogt, %5, %6 : vector<256x16xf32>
    %cst_6 = arith.constant 2.000000e-01 : f32
    %8 = vector.broadcast %cst_6 : f32 to vector<256x16xf32>
    %9 = arith.mulf %8, %5 : vector<256x16xf32>
    %10 = arith.select %7, %5, %9 : vector<256x16xi1>, vector<256x16xf32>
    %11 = arith.truncf %10 : vector<256x16xf32> to vector<256x16xbf16>
    %c0_7 = arith.constant 0 : index
    %c0_8 = arith.constant 0 : index
    %12 = vector.load %arg4[%c0_7, %c0_8] : memref<256x16xbf16, #tpu.memory_space<vmem>>, vector<256x16xbf16>
    tpu.vector_store %arg4[%c0_7, %c0_8], %11 {strides = array<i32>} : memref<256x16xbf16, #tpu.memory_space<vmem>>, vector<256x16xbf16>,
    return
  }
  func.func @transform_0(%arg0: i32) -> (i32, i32) {
    %c0_i32 = arith.constant 0 : i32
    %c0_i32_0 = arith.constant 0 : i32
    return %arg0, %c0_i32 : i32, i32
  }
  func.func @transform_1(%arg0: i32) -> (i32, i32) {
    %c0_i32 = arith.constant 0 : i32
    %c0_i32_0 = arith.constant 0 : i32
    %c0_i32_1 = arith.constant 0 : i32
    return %c0_i32, %c0_i32_0 : i32, i32
  }
  func.func @transform_2(%arg0: i32) -> (i32, i32) {
    %c0_i32 = arith.constant 0 : i32
    %c0_i32_0 = arith.constant 0 : i32
    %c0_i32_1 = arith.constant 0 : i32
    return %c0_i32, %c0_i32_0 : i32, i32
  }
  func.func @transform_3(%arg0: i32) -> (i32, i32) {
    %c0_i32 = arith.constant 0 : i32
    %c0_i32_0 = arith.constant 0 : i32
    return %arg0, %c0_i32 : i32, i32
  }
}

module attributes {stable_mosaic.version = 11 : i64} {
  func.func @_matmul_bias_lrelu_kernel(%arg0: i32, %arg1: memref<64x256xbf16, #tpu.memory_space<vmem>>, %arg2: memref<256x32xbf16, #tpu.memory_space<vmem>>, %arg3: memref<1x32xf32, #tpu.memory_space<vmem>>, %arg4: memref<64x32xbf16, #tpu.memory_space<vmem>>) attributes {dimension_semantics = [#tpu.dimension_semantics<parallel>], iteration_bounds = array<i64: 2>, scalar_prefetch = 0 : i64, scratch_operands = 0 : i64, tpu.core_type = #tpu.core_type<tc>, window_params = [{transform_indices = @transform_0, window_bounds = array<i64: 64, 256>}, {pipeline_mode = #tpu.pipeline_mode<synchronous>, transform_indices = @transform_1, window_bounds = array<i64: 256, 32>}, {pipeline_mode = #tpu.pipeline_mode<synchronous>, transform_indices = @transform_2, window_bounds = array<i64: 1, 32>}, {transform_indices = @transform_3, window_bounds = array<i64: 64, 32>}]} {
    %c0 = arith.constant 0 : index
    %c0_0 = arith.constant 0 : index
    %0 = vector.load %arg1[%c0, %c0_0] : memref<64x256xbf16, #tpu.memory_space<vmem>>, vector<64x256xbf16>
    %c0_1 = arith.constant 0 : index
    %c0_2 = arith.constant 0 : index
    %1 = vector.load %arg2[%c0_1, %c0_2] : memref<256x32xbf16, #tpu.memory_space<vmem>>, vector<256x32xbf16>
    %cst = arith.constant dense<0.000000e+00> : vector<64x32xf32>
    %2 = tpu.matmul %0, %1, %cst {dimension_numbers = #tpu.dot_dimension_numbers<[1], [0], [0], [1], [0, 0, 1, 1], [], []>} : vector<64x256xbf16>, vector<256x32xbf16>, vector<64x32xf32> -> vector<64x32xf32>
    %c0_3 = arith.constant 0 : index
    %c0_4 = arith.constant 0 : index
    %3 = vector.load %arg3[%c0_3, %c0_4] : memref<1x32xf32, #tpu.memory_space<vmem>>, vector<1x32xf32>
    %4 = vector.broadcast %3 : vector<1x32xf32> to vector<64x32xf32>
    %5 = arith.addf %2, %4 : vector<64x32xf32>
    %cst_5 = arith.constant 0.000000e+00 : f32
    %6 = vector.broadcast %cst_5 : f32 to vector<64x32xf32>
    %7 = arith.cmpf ogt, %5, %6 : vector<64x32xf32>
    %cst_6 = arith.constant 2.000000e-01 : f32
    %8 = vector.broadcast %cst_6 : f32 to vector<64x32xf32>
    %9 = arith.mulf %8, %5 : vector<64x32xf32>
    %10 = arith.select %7, %5, %9 : vector<64x32xi1>, vector<64x32xf32>
    %11 = arith.truncf %10 : vector<64x32xf32> to vector<64x32xbf16>
    %c0_7 = arith.constant 0 : index
    %c0_8 = arith.constant 0 : index
    %12 = vector.load %arg4[%c0_7, %c0_8] : memref<64x32xbf16, #tpu.memory_space<vmem>>, vector<64x32xbf16>
    tpu.vector_store %arg4[%c0_7, %c0_8], %11 {strides = array<i32>} : memref<64x32xbf16, #tpu.memory_space<vmem>>, vector<64x32xbf16>,
    return
  }
  func.func @transform_0(%arg0: i32) -> (i32, i32) {
    %c0_i32 = arith.constant 0 : i32
    %c0_i32_0 = arith.constant 0 : i32
    return %arg0, %c0_i32 : i32, i32
  }
  func.func @transform_1(%arg0: i32) -> (i32, i32) {
    %c0_i32 = arith.constant 0 : i32
    %c0_i32_0 = arith.constant 0 : i32
    %c0_i32_1 = arith.constant 0 : i32
    return %c0_i32, %c0_i32_0 : i32, i32
  }
  func.func @transform_2(%arg0: i32) -> (i32, i32) {
    %c0_i32 = arith.constant 0 : i32
    %c0_i32_0 = arith.constant 0 : i32
    %c0_i32_1 = arith.constant 0 : i32
    return %c0_i32, %c0_i32_0 : i32, i32
  }
  func.func @transform_3(%arg0: i32) -> (i32, i32) {
    %c0_i32 = arith.constant 0 : i32
    %c0_i32_0 = arith.constant 0 : i32
    return %arg0, %c0_i32 : i32, i32
  }
}

module attributes {stable_mosaic.version = 11 : i64} {
  func.func @_matmul_bias_lrelu_kernel(%arg0: i32, %arg1: memref<16x512xbf16, #tpu.memory_space<vmem>>, %arg2: memref<512x64xbf16, #tpu.memory_space<vmem>>, %arg3: memref<1x64xf32, #tpu.memory_space<vmem>>, %arg4: memref<16x64xbf16, #tpu.memory_space<vmem>>) attributes {dimension_semantics = [#tpu.dimension_semantics<parallel>], iteration_bounds = array<i64: 2>, scalar_prefetch = 0 : i64, scratch_operands = 0 : i64, tpu.core_type = #tpu.core_type<tc>, window_params = [{transform_indices = @transform_0, window_bounds = array<i64: 16, 512>}, {pipeline_mode = #tpu.pipeline_mode<synchronous>, transform_indices = @transform_1, window_bounds = array<i64: 512, 64>}, {pipeline_mode = #tpu.pipeline_mode<synchronous>, transform_indices = @transform_2, window_bounds = array<i64: 1, 64>}, {transform_indices = @transform_3, window_bounds = array<i64: 16, 64>}]} {
    %c0 = arith.constant 0 : index
    %c0_0 = arith.constant 0 : index
    %0 = vector.load %arg1[%c0, %c0_0] : memref<16x512xbf16, #tpu.memory_space<vmem>>, vector<16x512xbf16>
    %c0_1 = arith.constant 0 : index
    %c0_2 = arith.constant 0 : index
    %1 = vector.load %arg2[%c0_1, %c0_2] : memref<512x64xbf16, #tpu.memory_space<vmem>>, vector<512x64xbf16>
    %cst = arith.constant dense<0.000000e+00> : vector<16x64xf32>
    %2 = tpu.matmul %0, %1, %cst {dimension_numbers = #tpu.dot_dimension_numbers<[1], [0], [0], [1], [0, 0, 1, 1], [], []>} : vector<16x512xbf16>, vector<512x64xbf16>, vector<16x64xf32> -> vector<16x64xf32>
    %c0_3 = arith.constant 0 : index
    %c0_4 = arith.constant 0 : index
    %3 = vector.load %arg3[%c0_3, %c0_4] : memref<1x64xf32, #tpu.memory_space<vmem>>, vector<1x64xf32>
    %4 = vector.broadcast %3 : vector<1x64xf32> to vector<16x64xf32>
    %5 = arith.addf %2, %4 : vector<16x64xf32>
    %cst_5 = arith.constant 0.000000e+00 : f32
    %6 = vector.broadcast %cst_5 : f32 to vector<16x64xf32>
    %7 = arith.cmpf ogt, %5, %6 : vector<16x64xf32>
    %cst_6 = arith.constant 2.000000e-01 : f32
    %8 = vector.broadcast %cst_6 : f32 to vector<16x64xf32>
    %9 = arith.mulf %8, %5 : vector<16x64xf32>
    %10 = arith.select %7, %5, %9 : vector<16x64xi1>, vector<16x64xf32>
    %11 = arith.truncf %10 : vector<16x64xf32> to vector<16x64xbf16>
    %c0_7 = arith.constant 0 : index
    %c0_8 = arith.constant 0 : index
    %12 = vector.load %arg4[%c0_7, %c0_8] : memref<16x64xbf16, #tpu.memory_space<vmem>>, vector<16x64xbf16>
    tpu.vector_store %arg4[%c0_7, %c0_8], %11 {strides = array<i32>} : memref<16x64xbf16, #tpu.memory_space<vmem>>, vector<16x64xbf16>,
    return
  }
  func.func @transform_0(%arg0: i32) -> (i32, i32) {
    %c0_i32 = arith.constant 0 : i32
    %c0_i32_0 = arith.constant 0 : i32
    return %arg0, %c0_i32 : i32, i32
  }
  func.func @transform_1(%arg0: i32) -> (i32, i32) {
    %c0_i32 = arith.constant 0 : i32
    %c0_i32_0 = arith.constant 0 : i32
    %c0_i32_1 = arith.constant 0 : i32
    return %c0_i32, %c0_i32_0 : i32, i32
  }
  func.func @transform_2(%arg0: i32) -> (i32, i32) {
    %c0_i32 = arith.constant 0 : i32
    %c0_i32_0 = arith.constant 0 : i32
    %c0_i32_1 = arith.constant 0 : i32
    return %c0_i32, %c0_i32_0 : i32, i32
  }
  func.func @transform_3(%arg0: i32) -> (i32, i32) {
    %c0_i32 = arith.constant 0 : i32
    %c0_i32_0 = arith.constant 0 : i32
    return %arg0, %c0_i32 : i32, i32
  }
}

module attributes {stable_mosaic.version = 11 : i64} {
  func.func @_conv_lrelu_gmaxpool_fc_sigmoid_kernel(%arg0: i32, %arg1: i32, %arg2: memref<1x4x1024xbf16, #tpu.memory_space<vmem>>, %arg3: memref<1024x128xbf16, #tpu.memory_space<vmem>>, %arg4: memref<1x128xf32, #tpu.memory_space<vmem>>, %arg5: memref<1x128xf32, #tpu.memory_space<vmem>>, %arg6: memref<1x1xf32, #tpu.memory_space<vmem>>, %arg7: memref<1x1x128xf32, #tpu.memory_space<vmem>>, %arg8: memref<1x1x1xf32, #tpu.memory_space<vmem>>) attributes {dimension_semantics = [#tpu.dimension_semantics<parallel>, #tpu.dimension_semantics<arbitrary>], iteration_bounds = array<i64: 2, 1>, scalar_prefetch = 0 : i64, scratch_operands = 0 : i64, tpu.core_type = #tpu.core_type<tc>, window_params = [{transform_indices = @transform_0, window_bounds = array<i64: 1, 4, 1024>}, {pipeline_mode = #tpu.pipeline_mode<synchronous>, transform_indices = @transform_1, window_bounds = array<i64: 1024, 128>}, {pipeline_mode = #tpu.pipeline_mode<synchronous>, transform_indices = @transform_2, window_bounds = array<i64: 1, 128>}, {pipeline_mode = #tpu.pipeline_mode<synchronous>, transform_indices = @transform_3, window_bounds = array<i64: 1, 128>}, {pipeline_mode = #tpu.pipeline_mode<synchronous>, transform_indices = @transform_4, window_bounds = array<i64: 1, 1>}, {transform_indices = @transform_5, window_bounds = array<i64: 1, 1, 128>}, {transform_indices = @transform_6, window_bounds = array<i64: 1, 1, 1>}]} {
    %c0 = arith.constant 0 : index
    %c0_0 = arith.constant 0 : index
    %c0_1 = arith.constant 0 : index
    %0 = vector.load %arg2[%c0, %c0_0, %c0_1] : memref<1x4x1024xbf16, #tpu.memory_space<vmem>>, vector<1x4x1024xbf16>
    %1 = vector.shape_cast %0 : vector<1x4x1024xbf16> to vector<4x1024xbf16>
    %c0_2 = arith.constant 0 : index
    %c0_3 = arith.constant 0 : index
    %2 = vector.load %arg3[%c0_2, %c0_3] : memref<1024x128xbf16, #tpu.memory_space<vmem>>, vector<1024x128xbf16>
    %cst = arith.constant dense<0.000000e+00> : vector<4x128xf32>
    %3 = tpu.matmul %1, %2, %cst {dimension_numbers = #tpu.dot_dimension_numbers<[1], [0], [0], [1], [0, 0, 1, 1], [], []>} : vector<4x1024xbf16>, vector<1024x128xbf16>, vector<4x128xf32> -> vector<4x128xf32>
    %c0_4 = arith.constant 0 : index
    %c0_5 = arith.constant 0 : index
    %4 = vector.load %arg4[%c0_4, %c0_5] : memref<1x128xf32, #tpu.memory_space<vmem>>, vector<1x128xf32>
    %5 = vector.broadcast %4 : vector<1x128xf32> to vector<4x128xf32>
    %6 = arith.addf %3, %5 : vector<4x128xf32>
    %cst_6 = arith.constant 0.000000e+00 : f32
    %7 = vector.broadcast %cst_6 : f32 to vector<4x128xf32>
    %8 = arith.cmpf ogt, %6, %7 : vector<4x128xf32>
    %cst_7 = arith.constant 2.000000e-01 : f32
    %9 = vector.broadcast %cst_7 : f32 to vector<4x128xf32>
    %10 = arith.mulf %9, %6 : vector<4x128xf32>
    %11 = arith.select %8, %6, %10 : vector<4x128xi1>, vector<4x128xf32>
    %cst_8 = arith.constant dense<0xFF800000> : vector<128xf32>
    %12 = vector.multi_reduction <maximumf>, %11, %cst_8 [0] : vector<4x128xf32> to vector<128xf32>
    %13 = vector.shape_cast %12 : vector<128xf32> to vector<1x128xf32>
    %c0_i32 = arith.constant 0 : i32
    %14 = arith.cmpi eq, %arg1, %c0_i32 : i32
    %15 = arith.extui %14 : i1 to i32
    %c0_i32_9 = arith.constant 0 : i32
    %16 = arith.cmpi ne, %15, %c0_i32_9 : i32
    scf.if %16 {
      %c0_14 = arith.constant 0 : index
      %c0_15 = arith.constant 0 : index
      %c0_16 = arith.constant 0 : index
      %23 = vector.load %arg7[%c0_14, %c0_15, %c0_16] : memref<1x1x128xf32, #tpu.memory_space<vmem>>, vector<1x1x128xf32>
      %24 = vector.shape_cast %23 : vector<1x1x128xf32> to vector<1x128xf32>
      %25 = vector.shape_cast %13 : vector<1x128xf32> to vector<1x1x128xf32>
      tpu.vector_store %arg7[%c0_14, %c0_15, %c0_16], %25 {strides = array<i32>} : memref<1x1x128xf32, #tpu.memory_space<vmem>>, vector<1x1x128xf32>,
    } else {
    }
    %c0_i32_10 = arith.constant 0 : i32
    %17 = arith.cmpi sgt, %arg1, %c0_i32_10 : i32
    %18 = arith.extui %17 : i1 to i32
    %c0_i32_11 = arith.constant 0 : i32
    %19 = arith.cmpi ne, %18, %c0_i32_11 : i32
    scf.if %19 {
      %c0_14 = arith.constant 0 : index
      %c0_15 = arith.constant 0 : index
      %c0_16 = arith.constant 0 : index
      %23 = vector.load %arg7[%c0_14, %c0_15, %c0_16] : memref<1x1x128xf32, #tpu.memory_space<vmem>>, vector<1x1x128xf32>
      %24 = vector.shape_cast %23 : vector<1x1x128xf32> to vector<1x128xf32>
      %25 = arith.maximumf %24, %13 : vector<1x128xf32>
      %c0_17 = arith.constant 0 : index
      %c0_18 = arith.constant 0 : index
      %c0_19 = arith.constant 0 : index
      %26 = vector.load %arg7[%c0_17, %c0_18, %c0_19] : memref<1x1x128xf32, #tpu.memory_space<vmem>>, vector<1x1x128xf32>
      %27 = vector.shape_cast %26 : vector<1x1x128xf32> to vector<1x128xf32>
      %28 = vector.shape_cast %25 : vector<1x128xf32> to vector<1x1x128xf32>
      tpu.vector_store %arg7[%c0_17, %c0_18, %c0_19], %28 {strides = array<i32>} : memref<1x1x128xf32, #tpu.memory_space<vmem>>, vector<1x1x128xf32>,
    } else {
    }
    %c0_i32_12 = arith.constant 0 : i32
    %20 = arith.cmpi eq, %arg1, %c0_i32_12 : i32
    %21 = arith.extui %20 : i1 to i32
    %c0_i32_13 = arith.constant 0 : i32
    %22 = arith.cmpi ne, %21, %c0_i32_13 : i32
    scf.if %22 {
      %c0_14 = arith.constant 0 : index
      %c0_15 = arith.constant 0 : index
      %c0_16 = arith.constant 0 : index
      %23 = vector.load %arg7[%c0_14, %c0_15, %c0_16] : memref<1x1x128xf32, #tpu.memory_space<vmem>>, vector<1x1x128xf32>
      %24 = vector.shape_cast %23 : vector<1x1x128xf32> to vector<1x128xf32>
      %c0_17 = arith.constant 0 : index
      %c0_18 = arith.constant 0 : index
      %25 = vector.load %arg5[%c0_17, %c0_18] : memref<1x128xf32, #tpu.memory_space<vmem>>, vector<1x128xf32>
      %26 = arith.mulf %24, %25 : vector<1x128xf32>
      %cst_19 = arith.constant dense<0.000000e+00> : vector<1xf32>
      %27 = vector.multi_reduction <add>, %26, %cst_19 [1] : vector<1x128xf32> to vector<1xf32>
      %28 = vector.shape_cast %27 : vector<1xf32> to vector<1x1xf32>
      %c0_20 = arith.constant 0 : index
      %c0_21 = arith.constant 0 : index
      %29 = vector.load %arg6[%c0_20, %c0_21] : memref<1x1xf32, #tpu.memory_space<vmem>>, vector<1x1xf32>
      %30 = arith.addf %28, %29 : vector<1x1xf32>
      %31 = arith.negf %30 : vector<1x1xf32>
      %32 = math.exp %31 : vector<1x1xf32>
      %cst_22 = arith.constant 1.000000e+00 : f32
      %33 = vector.broadcast %cst_22 : f32 to vector<1x1xf32>
      %34 = arith.addf %33, %32 : vector<1x1xf32>
      %35 = arith.divf %33, %34 : vector<1x1xf32>
      %c0_23 = arith.constant 0 : index
      %c0_24 = arith.constant 0 : index
      %c0_25 = arith.constant 0 : index
      %36 = vector.load %arg8[%c0_23, %c0_24, %c0_25] : memref<1x1x1xf32, #tpu.memory_space<vmem>>, vector<1x1x1xf32>
      %37 = vector.shape_cast %36 : vector<1x1x1xf32> to vector<1x1xf32>
      %38 = vector.shape_cast %35 : vector<1x1xf32> to vector<1x1x1xf32>
      tpu.vector_store %arg8[%c0_23, %c0_24, %c0_25], %38 {strides = array<i32>} : memref<1x1x1xf32, #tpu.memory_space<vmem>>, vector<1x1x1xf32>,
    } else {
    }
    return
  }
  func.func @transform_0(%arg0: i32, %arg1: i32) -> (i32, i32, i32) {
    %c0_i32 = arith.constant 0 : i32
    %c0_i32_0 = arith.constant 0 : i32
    return %arg0, %arg1, %c0_i32 : i32, i32, i32
  }
  func.func @transform_1(%arg0: i32, %arg1: i32) -> (i32, i32) {
    %c0_i32 = arith.constant 0 : i32
    %c0_i32_0 = arith.constant 0 : i32
    %c0_i32_1 = arith.constant 0 : i32
    return %c0_i32, %c0_i32_0 : i32, i32
  }
  func.func @transform_2(%arg0: i32, %arg1: i32) -> (i32, i32) {
    %c0_i32 = arith.constant 0 : i32
    %c0_i32_0 = arith.constant 0 : i32
    %c0_i32_1 = arith.constant 0 : i32
    return %c0_i32, %c0_i32_0 : i32, i32
  }
  func.func @transform_3(%arg0: i32, %arg1: i32) -> (i32, i32) {
    %c0_i32 = arith.constant 0 : i32
    %c0_i32_0 = arith.constant 0 : i32
    %c0_i32_1 = arith.constant 0 : i32
    return %c0_i32, %c0_i32_0 : i32, i32
  }
  func.func @transform_4(%arg0: i32, %arg1: i32) -> (i32, i32) {
    %c0_i32 = arith.constant 0 : i32
    %c0_i32_0 = arith.constant 0 : i32
    %c0_i32_1 = arith.constant 0 : i32
    return %c0_i32, %c0_i32_0 : i32, i32
  }
  func.func @transform_5(%arg0: i32, %arg1: i32) -> (i32, i32, i32) {
    %c0_i32 = arith.constant 0 : i32
    %c0_i32_0 = arith.constant 0 : i32
    %c0_i32_1 = arith.constant 0 : i32
    return %arg0, %c0_i32, %c0_i32_0 : i32, i32, i32
  }
  func.func @transform_6(%arg0: i32, %arg1: i32) -> (i32, i32, i32) {
    %c0_i32 = arith.constant 0 : i32
    %c0_i32_0 = arith.constant 0 : i32
    %c0_i32_1 = arith.constant 0 : i32
    return %arg0, %c0_i32, %c0_i32_0 : i32, i32, i32
  }
}

</mosaic_0001>

<llo_original>
// kernel: s4gan_discriminator_forward.4
$region0: #{s4gan_discriminator_forward.4}
  #allocation0 [shape = 'u32[]', space=smem, size = 0x4, offset = 0x4, fixed_abs, tag = 'smem constant byte address 0x4 - core index']
  #allocation1 [shape = 'u32[144,128]{1,0:T(1,128)}', space=vmem, size = 0x12000, scoped, tag = 'internal scratch']
  %s0 = inlined_call_operand.vmem [shape: bf16[512,128], index: 0, kind: input, shape index: {}]
  %s1 = inlined_call_operand.vmem [shape: bf16[128,16], index: 1, kind: input, shape index: {}]
  %s2 = inlined_call_operand.vmem [shape: f32[1,16], index: 2, kind: input, shape index: {}]
  %s3 = inlined_call_operand.vmem [shape: bf16[512,16], index: 3, kind: output, shape index: {}]
  %s4 = sld [smem:[#allocation0]]
  $region45: #{s4gan_discriminator_forward.4} parent=0
    _
  %s6 = ssub.s32 1, %s4
  %s7 = scalar_select 0, %s6, %s4
  loop: start=0, step=1, limit=4
  $region2: #{s4gan_discriminator_forward.4} parent=0 // loop_pre_header
    _
  $region3: #{s4gan_discriminator_forward.4} parent=0 // loop_header
    %s9 = sphi 0, %s13
    %p10 = scmp.ge.s32.totalorder %s9, 4
    %s19 = sphi 0, %s21
    %s22 = sphi 0, %s19
    %s23 = sphi 0, %s22
    %s39 = sphi 0, %s23
    %s43 = sphi 0, %s43
    %s45 = sphi 0, %s43
    %s46 = sphi 0, %s45
    %s60 = sphi 0, %s46
    %s64 = sphi 0, %s64
    %s66 = sphi 0, %s64
    %s67 = sphi 0, %s66
    %s81 = sphi 0, %s67
    %s87 = sphi 0, %s89
    %s90 = sphi 0, %s87
    %s91 = sphi 0, %s90
    %s107 = sphi 0, %s91
  $region4: #{s4gan_discriminator_forward.4} parent=0 // loop_header_branch
    %12 = sbr.rel (%p10) target = $region8
  $region5: #{s4gan_discriminator_forward.4} parent=0 // loop_body
    %s14 = ssub.s32 %s9, 1
    %s15 = ssub.s32 %s9, 2
    %s16 = sadd.s32 %s9, 1
    %s17 = ssub.s32 %s9, %s16
    %p18 = scmp.eq.s32.totalorder %s17, 0
    %s20 = sadd.s32 %s19, 1
    %s21 = scalar_select %p18, %s19, %s20
    %p24 = pneg %p18
    %p25 = scmp.eq.s32.totalorder %s9, 1
    %p26 = por %p24, %p25
    %p27 = scmp.ne.s32.totalorder %s19, %s22
    %p28 = scmp.eq.s32.totalorder %s9, 0
    %p29 = por %p27, %p28
    %p30 = scmp.ne.s32.totalorder %s19, %s22
    %p31 = scmp.eq.s32.totalorder %s14, 1
    %p32 = por %p30, %p31
    %p33 = scmp.ne.s32.totalorder %s22, %s23
    %p34 = scmp.eq.s32.totalorder %s14, 0
    %p35 = por %p33, %p34
    %p36 = scmp.ne.s32.totalorder %s22, %s23
    %p37 = scmp.eq.s32.totalorder %s15, 1
    %p38 = por %p36, %p37
    %p40 = scmp.ne.s32.totalorder %s23, %s39
    %p41 = scmp.eq.s32.totalorder %s15, 0
    %p42 = por %p40, %p41
    %s44 = sadd.s32 %s43, 1
    %p47 = scmp.eq.s32.totalorder %s9, 1
    %p48 = scmp.ne.s32.totalorder %s43, %s45
    %p49 = scmp.eq.s32.totalorder %s9, 0
    %p50 = por %p48, %p49
    %p51 = scmp.ne.s32.totalorder %s43, %s45
    %p52 = scmp.eq.s32.totalorder %s14, 1
    %p53 = por %p51, %p52
    %p54 = scmp.ne.s32.totalorder %s45, %s46
    %p55 = scmp.eq.s32.totalorder %s14, 0
    %p56 = por %p54, %p55
    %p57 = scmp.ne.s32.totalorder %s45, %s46
    %p58 = scmp.eq.s32.totalorder %s15, 1
    %p59 = por %p57, %p58
    %p61 = scmp.ne.s32.totalorder %s46, %s60
    %p62 = scmp.eq.s32.totalorder %s15, 0
    %p63 = por %p61, %p62
    %s65 = sadd.s32 %s64, 1
    %p68 = scmp.eq.s32.totalorder %s9, 1
    %p69 = scmp.ne.s32.totalorder %s64, %s66
    %p70 = scmp.eq.s32.totalorder %s9, 0
    %p71 = por %p69, %p70
    %p72 = scmp.ne.s32.totalorder %s64, %s66
    %p73 = scmp.eq.s32.totalorder %s14, 1
    %p74 = por %p72, %p73
    %p75 = scmp.ne.s32.totalorder %s66, %s67
    %p76 = scmp.eq.s32.totalorder %s14, 0
    %p77 = por %p75, %p76
    %p78 = scmp.ne.s32.totalorder %s66, %s67
    %p79 = scmp.eq.s32.totalorder %s15, 1
    %p80 = por %p78, %p79
    %p82 = scmp.ne.s32.totalorder %s67, %s81
    %p83 = scmp.eq.s32.totalorder %s15, 0
    %p84 = por %p82, %p83
    %s85 = ssub.s32 %s9, %s16
    %p86 = scmp.eq.s32.totalorder %s85, 0
    %s88 = sadd.s32 %s87, 1
    %s89 = scalar_select %p86, %s87, %s88
    %p92 = pneg %p86
    %p93 = scmp.eq.s32.totalorder %s9, 1
    %p94 = por %p92, %p93
    %p95 = scmp.ne.s32.totalorder %s87, %s90
    %p96 = scmp.eq.s32.totalorder %s9, 0
    %p97 = por %p95, %p96
    %p98 = scmp.ne.s32.totalorder %s87, %s90
    %p99 = scmp.eq.s32.totalorder %s14, 1
    %p100 = por %p98, %p99
    %p101 = scmp.ne.s32.totalorder %s90, %s91
    %p102 = scmp.eq.s32.totalorder %s14, 0
    %p103 = por %p101, %p102
    %p104 = scmp.ne.s32.totalorder %s90, %s91
    %p105 = scmp.eq.s32.totalorder %s15, 1
    %p106 = por %p104, %p105
    %p108 = scmp.ne.s32.totalorder %s91, %s107
    %p109 = scmp.eq.s32.totalorder %s15, 0
    %p110 = por %p108, %p109
    %p111 = scmp.le.s32.totalorder 1, %s9
    %p112 = scmp.lt.s32.totalorder %s9, 3
    %p113 = pnand %p111, %p112
    %p114 = pneg %p113
    // Predicated region
    $region9: #{s4gan_discriminator_forward.4} parent=5 // pred_check
      _
    $region10: #{s4gan_discriminator_forward.4} parent=5 // pred_check_branch
      %116 = sbr.rel (%p113) target = $region12
    $region11: #{s4gan_discriminator_forward.4} parent=5 // pred_region
      %s117 = ssub.s32 %s9, 1
      // Predicated region
      $region13: #{s4gan_discriminator_forward.4} parent=11 // pred_check
        %p118 = pneg %p56
      $region14: #{s4gan_discriminator_forward.4} parent=11 // pred_check_branch
        %120 = sbr.rel (%p118) target = $region16
      $region15: #{s4gan_discriminator_forward.4} parent=11 // pred_region
        _
      $region16: #{s4gan_discriminator_forward.4} parent=11 // pred_fallthru
        _
      // Predicated region
      $region17: #{s4gan_discriminator_forward.4} parent=11 // pred_check
        %p121 = pneg %p77
      $region18: #{s4gan_discriminator_forward.4} parent=11 // pred_check_branch
        %123 = sbr.rel (%p121) target = $region20
      $region19: #{s4gan_discriminator_forward.4} parent=11 // pred_region
        _
      $region20: #{s4gan_discriminator_forward.4} parent=11 // pred_fallthru
        _
    $region12: #{s4gan_discriminator_forward.4} parent=5 // pred_fallthru
      _
    %p124 = scmp.lt.s32.totalorder %s9, 2
    // Predicated region
    $region21: #{s4gan_discriminator_forward.4} parent=5 // pred_check
      %p125 = pneg %p124
    $region22: #{s4gan_discriminator_forward.4} parent=5 // pred_check_branch
      %127 = sbr.rel (%p125) target = $region24
    $region23: #{s4gan_discriminator_forward.4} parent=5 // pred_region
      // Predicated region
      $region25: #{s4gan_discriminator_forward.4} parent=23 // pred_check
        %p128 = pneg %p29
      $region26: #{s4gan_discriminator_forward.4} parent=23 // pred_check_branch
        %130 = sbr.rel (%p128) target = $region28
      $region27: #{s4gan_discriminator_forward.4} parent=23 // pred_region
        %s131 = smul.u32 32, %s9
        %p132 = scmp.lt.s32.totalorder %s131, 63
        %s133 = scalar_select %p132, %s131, 63
        %s134 = smul.addr %s133, 4
        %s135 = scalar_lea.vmem %s0, %s134
        %s136 = smul.u32 32, %s9
      $region28: #{s4gan_discriminator_forward.4} parent=23 // pred_fallthru
        _
    $region24: #{s4gan_discriminator_forward.4} parent=5 // pred_fallthru
      _
    %p137 = scmp.le.s32.totalorder 1, %s9
    %p138 = scmp.lt.s32.totalorder %s9, 3
    %p139 = pnand %p137, %p138
    %p140 = pneg %p139
    // Predicated region
    $region29: #{s4gan_discriminator_forward.4} parent=5 // pred_check
      _
    $region30: #{s4gan_discriminator_forward.4} parent=5 // pred_check_branch
      %142 = sbr.rel (%p139) target = $region32
    $region31: #{s4gan_discriminator_forward.4} parent=5 // pred_region
      %s143 = ssub.s32 %s9, 1
      %s144 = smul.u32 32, %s14
      %p145 = scmp.lt.s32.totalorder %s144, 63
      %s146 = scalar_select %p145, %s144, 63
      %s147 = smul.addr %s146, 4
      %s148 = scalar_lea.vmem %s0, %s147
      %p149 = pneg %p35
      %p150 = pneg %p32
      %p151 = pneg %p56
      %p152 = pneg %p53
      %p153 = pneg %p77
      %p154 = pneg %p74
      %p155 = pneg %p103
      %p156 = pneg %p100
      %s157 = smul.u32 32, %s14
      %p158 = scmp.lt.s32.totalorder %s157, 63
      %s159 = scalar_select %p158, %s157, 63
      %s160 = smul.addr %s159, 4
      %s161 = scalar_lea.vmem %s3, %s160
      %s162 = smul.u32 32, %s14
      %p163 = scmp.lt.s32.totalorder %s162, 63
      %s164 = scalar_select %p163, %s162, 63
      %s165 = smul.addr %s164, 4
      %s166 = scalar_lea.vmem %s0, %s165
      %s167 = smul.u32 32, %s14
      %s168 = smul.u32 32, %s14
      %p169 = scmp.lt.s32.totalorder %s168, 63
      %s170 = scalar_select %p169, %s168, 63
      %s171 = smul.addr %s170, 4
      %s172 = scalar_lea.vmem %s3, %s171
      %s173 = smul.u32 32, %s14
      %v175 = vld [vmem:[%s166] sm:$0xf]
      %v176 = vld [vmem:[%s166 + $0x4] sm:$0xf]
      %v177 = vld [vmem:[%s166 + $0x8] sm:$0xf]
      %v178 = vld [vmem:[%s166 + $0xc] sm:$0xf]
      %v179 = vld [vmem:[%s166 + $0x10] sm:$0xf]
      %v180 = vld [vmem:[%s166 + $0x14] sm:$0xf]
      %v181 = vld [vmem:[%s166 + $0x18] sm:$0xf]
      %v182 = vld [vmem:[%s166 + $0x1c] sm:$0xf]
      %v183 = vld [vmem:[%s166 + $0x20] sm:$0xf]
      %v184 = vld [vmem:[%s166 + $0x24] sm:$0xf]
      %v185 = vld [vmem:[%s166 + $0x28] sm:$0xf]
      %v186 = vld [vmem:[%s166 + $0x2c] sm:$0xf]
      %v187 = vld [vmem:[%s166 + $0x30] sm:$0xf]
      %v188 = vld [vmem:[%s166 + $0x34] sm:$0xf]
      %v189 = vld [vmem:[%s166 + $0x38] sm:$0xf]
      %v190 = vld [vmem:[%s166 + $0x3c] sm:$0xf]
      %v191 = vld [vmem:[%s166 + $0x40] sm:$0xf]
      %v192 = vld [vmem:[%s166 + $0x44] sm:$0xf]
      %v193 = vld [vmem:[%s166 + $0x48] sm:$0xf]
      %v194 = vld [vmem:[%s166 + $0x4c] sm:$0xf]
      %v195 = vld [vmem:[%s166 + $0x50] sm:$0xf]
      %v196 = vld [vmem:[%s166 + $0x54] sm:$0xf]
      %v197 = vld [vmem:[%s166 + $0x58] sm:$0xf]
      %v198 = vld [vmem:[%s166 + $0x5c] sm:$0xf]
      %v199 = vld [vmem:[%s166 + $0x60] sm:$0xf]
      %v200 = vld [vmem:[%s166 + $0x64] sm:$0xf]
      %v201 = vld [vmem:[%s166 + $0x68] sm:$0xf]
      %v202 = vld [vmem:[%s166 + $0x6c] sm:$0xf]
      %v203 = vld [vmem:[%s166 + $0x70] sm:$0xf]
      %v204 = vld [vmem:[%s166 + $0x74] sm:$0xf]
      %v205 = vld [vmem:[%s166 + $0x78] sm:$0xf]
      %v206 = vld [vmem:[%s166 + $0x7c] sm:$0xf]
      %v207 = vld [vmem:[%s1] sm:$0xf]
      %v208 = vld [vmem:[%s1 + $0x4] sm:$0xf]
      %v209 = vld [vmem:[%s1 + $0x8] sm:$0xf]
      %v210 = vld [vmem:[%s1 + $0xc] sm:$0xf]
      %v211 = vld [vmem:[%s1 + $0x10] sm:$0xf]
      %v212 = vld [vmem:[%s1 + $0x14] sm:$0xf]
      %v213 = vld [vmem:[%s1 + $0x18] sm:$0xf]
      %v214 = vld [vmem:[%s1 + $0x1c] sm:$0xf]
      %v215 = vld [vmem:[%s1 + $0x20] sm:$0xf]
      %v216 = vld [vmem:[%s1 + $0x24] sm:$0xf]
      %v217 = vld [vmem:[%s1 + $0x28] sm:$0xf]
      %v218 = vld [vmem:[%s1 + $0x2c] sm:$0xf]
      %v219 = vld [vmem:[%s1 + $0x30] sm:$0xf]
      %v220 = vld [vmem:[%s1 + $0x34] sm:$0xf]
      %v221 = vld [vmem:[%s1 + $0x38] sm:$0xf]
      %v222 = vld [vmem:[%s1 + $0x3c] sm:$0xf]
      %v223 = vld [vmem:[%s2] sm:$0x1]
      %v225 = vlaneseq
      %v226 = vshrl.u32 %v225, 7
      %v227 = vsub.s32 0, %v226
      %v228 = vrot.slane %v223, %v227
      %v262 = vunpack.c.l.b16 %v175
      %v263 = vunpack.c.l.b16 %v176
      %v264 = vunpack.c.l.b16 %v177
      %v265 = vunpack.c.l.b16 %v178
      %v266 = vunpack.c.l.b16 %v179
      %v267 = vunpack.c.l.b16 %v180
      %v268 = vunpack.c.l.b16 %v181
      %v269 = vunpack.c.l.b16 %v182
      %v270 = vunpack.c.l.b16 %v183
      %v271 = vunpack.c.l.b16 %v184
      %v272 = vunpack.c.l.b16 %v185
      %v273 = vunpack.c.l.b16 %v186
      %v274 = vunpack.c.l.b16 %v187
      %v275 = vunpack.c.l.b16 %v188
      %v276 = vunpack.c.l.b16 %v189
      %v277 = vunpack.c.l.b16 %v190
      %v278 = vunpack.c.l.b16 %v191
      %v279 = vunpack.c.l.b16 %v192
      %v280 = vunpack.c.l.b16 %v193
      %v281 = vunpack.c.l.b16 %v194
      %v282 = vunpack.c.l.b16 %v195
      %v283 = vunpack.c.l.b16 %v196
      %v284 = vunpack.c.l.b16 %v197
      %v285 = vunpack.c.l.b16 %v198
      %v286 = vunpack.c.l.b16 %v199
      %v287 = vunpack.c.l.b16 %v200
      %v288 = vunpack.c.l.b16 %v201
      %v289 = vunpack.c.l.b16 %v202
      %v290 = vunpack.c.l.b16 %v203
      %v291 = vunpack.c.l.b16 %v204
      %v292 = vunpack.c.l.b16 %v205
      %v293 = vunpack.c.l.b16 %v206
      %v294 = vpack.c.b16 %v263, %v262
      %v295 = vpack.c.b16 %v265, %v264
      %v296 = vpack.c.b16 %v267, %v266
      %v297 = vpack.c.b16 %v269, %v268
      %v298 = vpack.c.b16 %v271, %v270
      %v299 = vpack.c.b16 %v273, %v272
      %v300 = vpack.c.b16 %v275, %v274
      %v301 = vpack.c.b16 %v277, %v276
      %v302 = vpack.c.b16 %v279, %v278
      %v303 = vpack.c.b16 %v281, %v280
      %v304 = vpack.c.b16 %v283, %v282
      %v305 = vpack.c.b16 %v285, %v284
      %v306 = vpack.c.b16 %v287, %v286
      %v307 = vpack.c.b16 %v289, %v288
      %v308 = vpack.c.b16 %v291, %v290
      %v309 = vpack.c.b16 %v293, %v292
      %v342 = vunpack.c.l.b16 %v207
      %v343 = vunpack.c.l.b16 %v208
      %v344 = vunpack.c.l.b16 %v209
      %v345 = vunpack.c.l.b16 %v210
      %v346 = vunpack.c.l.b16 %v211
      %v347 = vunpack.c.l.b16 %v212
      %v348 = vunpack.c.l.b16 %v213
      %v349 = vunpack.c.l.b16 %v214
      %v350 = vunpack.c.l.b16 %v215
      %v351 = vunpack.c.l.b16 %v216
      %v352 = vunpack.c.l.b16 %v217
      %v353 = vunpack.c.l.b16 %v218
      %v354 = vunpack.c.l.b16 %v219
      %v355 = vunpack.c.l.b16 %v220
      %v356 = vunpack.c.l.b16 %v221
      %v357 = vunpack.c.l.b16 %v222
      %v358 = vpack.c.b16 %v343, %v342
      %v359 = vpack.c.b16 %v345, %v344
      %v360 = vpack.c.b16 %v347, %v346
      %v361 = vpack.c.b16 %v349, %v348
      %v362 = vpack.c.b16 %v351, %v350
      %v363 = vpack.c.b16 %v353, %v352
      %v364 = vpack.c.b16 %v355, %v354
      %v365 = vpack.c.b16 %v357, %v356
      %374 = vmatprep.subr.bf16.mxu0 0
      %375 = vmatpush1.bf16.msra.mxu0 %v358
      %376 = vmatprep.subr.bf16.mxu0 0
      %377 = vmatpush1.bf16.msra.mxu0 %v359
      %378 = vmatprep.subr.bf16.mxu0 0
      %379 = vmatpush1.bf16.msra.mxu0 %v360
      %380 = vmatprep.subr.bf16.mxu0 0
      %381 = vmatpush1.bf16.msra.mxu0 %v361
      %382 = vmatprep.subr.bf16.mxu0 0
      %383 = vmatpush1.bf16.msra.mxu0 %v362
      %384 = vmatprep.subr.bf16.mxu0 0
      %385 = vmatpush1.bf16.msra.mxu0 %v363
      %386 = vmatprep.subr.bf16.mxu0 0
      %387 = vmatpush1.bf16.msra.mxu0 %v364
      %388 = vmatprep.subr.bf16.mxu0 0
      %389 = vmatpush1.bf16.msra.mxu0 %v365
      %390 = vmatprep.subr.bf16.mxu0 0
      %391 = vmatpush1.bf16.msra.mxu0 0
      %392 = vmatprep.subr.bf16.mxu0 0
      %393 = vmatpush1.bf16.msra.mxu0 0
      %394 = vmatprep.subr.bf16.mxu0 0
      %395 = vmatpush1.bf16.msra.mxu0 0
      %396 = vmatprep.subr.bf16.mxu0 0
      %397 = vmatpush1.bf16.msra.mxu0 0
      %398 = vmatprep.subr.bf16.mxu0 0
      %399 = vmatpush1.bf16.msra.mxu0 0
      %400 = vmatprep.subr.bf16.mxu0 0
      %401 = vmatpush1.bf16.msra.mxu0 0
      %402 = vmatprep.subr.bf16.mxu0 0
      %403 = vmatpush1.bf16.msra.mxu0 0
      %404 = vmatprep.subr.bf16.mxu0 0
      %405 = vmatpush1.bf16.msra.mxu0 0
      %406 = vmatprep.mubr.bf16.mxu0 0
      %407 = vmatmul.mubr.bf16.gmra.mrb[0].mxu0 %v294
      %v408 = vpop.f32.mrb[0].mxu0
      %v409 = vadd.f32 %v228, %v408
      %v410 = vpop.f32.mrb[0].mxu0
      %v411 = vpop.f32.mrb[0].mxu0
      %v412 = vadd.f32 %v228, %v411
      %v413 = vpop.f32.mrb[0].mxu0
      %414 = vmatprep.mubr.bf16.mxu0 0
      %415 = vmatmul.mubr.bf16.gmra.mrb[0].mxu0 %v295
      %v416 = vpop.f32.mrb[0].mxu0
      %v417 = vadd.f32 %v228, %v416
      %v418 = vpop.f32.mrb[0].mxu0
      %v419 = vpop.f32.mrb[0].mxu0
      %v420 = vadd.f32 %v228, %v419
      %v421 = vpop.f32.mrb[0].mxu0
      %422 = vmatprep.mubr.bf16.mxu0 0
      %423 = vmatmul.mubr.bf16.gmra.mrb[0].mxu0 %v296
      %v424 = vpop.f32.mrb[0].mxu0
      %v425 = vadd.f32 %v228, %v424
      %v426 = vpop.f32.mrb[0].mxu0
      %v427 = vpop.f32.mrb[0].mxu0
      %v428 = vadd.f32 %v228, %v427
      %v429 = vpop.f32.mrb[0].mxu0
      %430 = vmatprep.mubr.bf16.mxu0 0
      %431 = vmatmul.mubr.bf16.gmra.mrb[0].mxu0 %v297
      %v432 = vpop.f32.mrb[0].mxu0
      %v433 = vadd.f32 %v228, %v432
      %v434 = vpop.f32.mrb[0].mxu0
      %v435 = vpop.f32.mrb[0].mxu0
      %v436 = vadd.f32 %v228, %v435
      %v437 = vpop.f32.mrb[0].mxu0
      %438 = vmatprep.mubr.bf16.mxu0 0
      %439 = vmatmul.mubr.bf16.gmra.mrb[0].mxu0 %v298
      %v440 = vpop.f32.mrb[0].mxu0
      %v441 = vadd.f32 %v228, %v440
      %v442 = vpop.f32.mrb[0].mxu0
      %v443 = vpop.f32.mrb[0].mxu0
      %v444 = vadd.f32 %v228, %v443
      %v445 = vpop.f32.mrb[0].mxu0
      %446 = vmatprep.mubr.bf16.mxu0 0
      %447 = vmatmul.mubr.bf16.gmra.mrb[0].mxu0 %v299
      %v448 = vpop.f32.mrb[0].mxu0
      %v449 = vadd.f32 %v228, %v448
      %v450 = vpop.f32.mrb[0].mxu0
      %v451 = vpop.f32.mrb[0].mxu0
      %v452 = vadd.f32 %v228, %v451
      %v453 = vpop.f32.mrb[0].mxu0
      %454 = vmatprep.mubr.bf16.mxu0 0
      %455 = vmatmul.mubr.bf16.gmra.mrb[0].mxu0 %v300
      %v456 = vpop.f32.mrb[0].mxu0
      %v457 = vadd.f32 %v228, %v456
      %v458 = vpop.f32.mrb[0].mxu0
      %v459 = vpop.f32.mrb[0].mxu0
      %v460 = vadd.f32 %v228, %v459
      %v461 = vpop.f32.mrb[0].mxu0
      %462 = vmatprep.mubr.bf16.mxu0 0
      %463 = vmatmul.mubr.bf16.gmra.mrb[0].mxu0 %v301
      %v464 = vpop.f32.mrb[0].mxu0
      %v465 = vadd.f32 %v228, %v464
      %v466 = vpop.f32.mrb[0].mxu0
      %v467 = vpop.f32.mrb[0].mxu0
      %v468 = vadd.f32 %v228, %v467
      %v469 = vpop.f32.mrb[0].mxu0
      %470 = vmatprep.mubr.bf16.mxu0 0
      %471 = vmatmul.mubr.bf16.gmra.mrb[0].mxu0 %v302
      %v472 = vpop.f32.mrb[0].mxu0
      %v473 = vadd.f32 %v228, %v472
      %v474 = vpop.f32.mrb[0].mxu0
      %v475 = vpop.f32.mrb[0].mxu0
      %v476 = vadd.f32 %v228, %v475
      %v477 = vpop.f32.mrb[0].mxu0
      %478 = vmatprep.mubr.bf16.mxu0 0
      %479 = vmatmul.mubr.bf16.gmra.mrb[0].mxu0 %v303
      %v480 = vpop.f32.mrb[0].mxu0
      %v481 = vadd.f32 %v228, %v480
      %v482 = vpop.f32.mrb[0].mxu0
      %v483 = vpop.f32.mrb[0].mxu0
      %v484 = vadd.f32 %v228, %v483
      %v485 = vpop.f32.mrb[0].mxu0
      %486 = vmatprep.mubr.bf16.mxu0 0
      %487 = vmatmul.mubr.bf16.gmra.mrb[0].mxu0 %v304
      %v488 = vpop.f32.mrb[0].mxu0
      %v489 = vadd.f32 %v228, %v488
      %v490 = vpop.f32.mrb[0].mxu0
      %v491 = vpop.f32.mrb[0].mxu0
      %v492 = vadd.f32 %v228, %v491
      %v493 = vpop.f32.mrb[0].mxu0
      %494 = vmatprep.mubr.bf16.mxu0 0
      %495 = vmatmul.mubr.bf16.gmra.mrb[0].mxu0 %v305
      %v496 = vpop.f32.mrb[0].mxu0
      %v497 = vadd.f32 %v228, %v496
      %v498 = vpop.f32.mrb[0].mxu0
      %v499 = vpop.f32.mrb[0].mxu0
      %v500 = vadd.f32 %v228, %v499
      %v501 = vpop.f32.mrb[0].mxu0
      %502 = vmatprep.mubr.bf16.mxu0 0
      %503 = vmatmul.mubr.bf16.gmra.mrb[0].mxu0 %v306
      %v504 = vpop.f32.mrb[0].mxu0
      %v505 = vadd.f32 %v228, %v504
      %v506 = vpop.f32.mrb[0].mxu0
      %v507 = vpop.f32.mrb[0].mxu0
      %v508 = vadd.f32 %v228, %v507
      %v509 = vpop.f32.mrb[0].mxu0
      %510 = vmatprep.mubr.bf16.mxu0 0
      %511 = vmatmul.mubr.bf16.gmra.mrb[0].mxu0 %v307
      %v512 = vpop.f32.mrb[0].mxu0
      %v513 = vadd.f32 %v228, %v512
      %v514 = vpop.f32.mrb[0].mxu0
      %v515 = vpop.f32.mrb[0].mxu0
      %v516 = vadd.f32 %v228, %v515
      %v517 = vpop.f32.mrb[0].mxu0
      %518 = vmatprep.mubr.bf16.mxu0 0
      %519 = vmatmul.mubr.bf16.gmra.mrb[0].mxu0 %v308
      %v520 = vpop.f32.mrb[0].mxu0
      %v521 = vadd.f32 %v228, %v520
      %v522 = vpop.f32.mrb[0].mxu0
      %v523 = vpop.f32.mrb[0].mxu0
      %v524 = vadd.f32 %v228, %v523
      %v525 = vpop.f32.mrb[0].mxu0
      %526 = vmatprep.mubr.bf16.mxu0 0
      %527 = vmatmul.mubr.bf16.gmra.mrb[0].mxu0 %v309
      %v528 = vpop.f32.mrb[0].mxu0
      %v529 = vadd.f32 %v228, %v528
      %v530 = vpop.f32.mrb[0].mxu0
      %v531 = vpop.f32.mrb[0].mxu0
      %v532 = vadd.f32 %v228, %v531
      %v533 = vpop.f32.mrb[0].mxu0
      %534 = vdwg.mxu0
      %vm535 = vcmp.gt.f32.partialorder %v409, 0.0
      %vm536 = vcmp.gt.f32.partialorder %v412, 0.0
      %vm537 = vcmp.gt.f32.partialorder %v417, 0.0
      %vm538 = vcmp.gt.f32.partialorder %v420, 0.0
      %vm539 = vcmp.gt.f32.partialorder %v425, 0.0
      %vm540 = vcmp.gt.f32.partialorder %v428, 0.0
      %vm541 = vcmp.gt.f32.partialorder %v433, 0.0
      %vm542 = vcmp.gt.f32.partialorder %v436, 0.0
      %vm543 = vcmp.gt.f32.partialorder %v441, 0.0
      %vm544 = vcmp.gt.f32.partialorder %v444, 0.0
      %vm545 = vcmp.gt.f32.partialorder %v449, 0.0
      %vm546 = vcmp.gt.f32.partialorder %v452, 0.0
      %vm547 = vcmp.gt.f32.partialorder %v457, 0.0
      %vm548 = vcmp.gt.f32.partialorder %v460, 0.0
      %vm549 = vcmp.gt.f32.partialorder %v465, 0.0
      %vm550 = vcmp.gt.f32.partialorder %v468, 0.0
      %vm551 = vcmp.gt.f32.partialorder %v473, 0.0
      %vm552 = vcmp.gt.f32.partialorder %v476, 0.0
      %vm553 = vcmp.gt.f32.partialorder %v481, 0.0
      %vm554 = vcmp.gt.f32.partialorder %v484, 0.0
      %vm555 = vcmp.gt.f32.partialorder %v489, 0.0
      %vm556 = vcmp.gt.f32.partialorder %v492, 0.0
      %vm557 = vcmp.gt.f32.partialorder %v497, 0.0
      %vm558 = vcmp.gt.f32.partialorder %v500, 0.0
      %vm559 = vcmp.gt.f32.partialorder %v505, 0.0
      %vm560 = vcmp.gt.f32.partialorder %v508, 0.0
      %vm561 = vcmp.gt.f32.partialorder %v513, 0.0
      %vm562 = vcmp.gt.f32.partialorder %v516, 0.0
      %vm563 = vcmp.gt.f32.partialorder %v521, 0.0
      %vm564 = vcmp.gt.f32.partialorder %v524, 0.0
      %vm565 = vcmp.gt.f32.partialorder %v529, 0.0
      %vm566 = vcmp.gt.f32.partialorder %v532, 0.0
      %v567 = vmul.f32 %v409, 0.2
      %v568 = vmul.f32 %v412, 0.2
      %v569 = vmul.f32 %v417, 0.2
      %v570 = vmul.f32 %v420, 0.2
      %v571 = vmul.f32 %v425, 0.2
      %v572 = vmul.f32 %v428, 0.2
      %v573 = vmul.f32 %v433, 0.2
      %v574 = vmul.f32 %v436, 0.2
      %v575 = vmul.f32 %v441, 0.2
      %v576 = vmul.f32 %v444, 0.2
      %v577 = vmul.f32 %v449, 0.2
      %v578 = vmul.f32 %v452, 0.2
      %v579 = vmul.f32 %v457, 0.2
      %v580 = vmul.f32 %v460, 0.2
      %v581 = vmul.f32 %v465, 0.2
      %v582 = vmul.f32 %v468, 0.2
      %v583 = vmul.f32 %v473, 0.2
      %v584 = vmul.f32 %v476, 0.2
      %v585 = vmul.f32 %v481, 0.2
      %v586 = vmul.f32 %v484, 0.2
      %v587 = vmul.f32 %v489, 0.2
      %v588 = vmul.f32 %v492, 0.2
      %v589 = vmul.f32 %v497, 0.2
      %v590 = vmul.f32 %v500, 0.2
      %v591 = vmul.f32 %v505, 0.2
      %v592 = vmul.f32 %v508, 0.2
      %v593 = vmul.f32 %v513, 0.2
      %v594 = vmul.f32 %v516, 0.2
      %v595 = vmul.f32 %v521, 0.2
      %v596 = vmul.f32 %v524, 0.2
      %v597 = vmul.f32 %v529, 0.2
      %v598 = vmul.f32 %v532, 0.2
      %v599 = vsel %vm535, %v409, %v567
      %v600 = vsel %vm536, %v412, %v568
      %v601 = vsel %vm537, %v417, %v569
      %v602 = vsel %vm538, %v420, %v570
      %v603 = vsel %vm539, %v425, %v571
      %v604 = vsel %vm540, %v428, %v572
      %v605 = vsel %vm541, %v433, %v573
      %v606 = vsel %vm542, %v436, %v574
      %v607 = vsel %vm543, %v441, %v575
      %v608 = vsel %vm544, %v444, %v576
      %v609 = vsel %vm545, %v449, %v577
      %v610 = vsel %vm546, %v452, %v578
      %v611 = vsel %vm547, %v457, %v579
      %v612 = vsel %vm548, %v460, %v580
      %v613 = vsel %vm549, %v465, %v581
      %v614 = vsel %vm550, %v468, %v582
      %v615 = vsel %vm551, %v473, %v583
      %v616 = vsel %vm552, %v476, %v584
      %v617 = vsel %vm553, %v481, %v585
      %v618 = vsel %vm554, %v484, %v586
      %v619 = vsel %vm555, %v489, %v587
      %v620 = vsel %vm556, %v492, %v588
      %v621 = vsel %vm557, %v497, %v589
      %v622 = vsel %vm558, %v500, %v590
      %v623 = vsel %vm559, %v505, %v591
      %v624 = vsel %vm560, %v508, %v592
      %v625 = vsel %vm561, %v513, %v593
      %v626 = vsel %vm562, %v516, %v594
      %v627 = vsel %vm563, %v521, %v595
      %v628 = vsel %vm564, %v524, %v596
      %v629 = vsel %vm565, %v529, %v597
      %v630 = vsel %vm566, %v532, %v598
      %v631 = vpack.c.bf16 %v600, %v599
      %v632 = vpack.c.bf16 %v602, %v601
      %v633 = vpack.c.bf16 %v604, %v603
      %v634 = vpack.c.bf16 %v606, %v605
      %v635 = vpack.c.bf16 %v608, %v607
      %v636 = vpack.c.bf16 %v610, %v609
      %v637 = vpack.c.bf16 %v612, %v611
      %v638 = vpack.c.bf16 %v614, %v613
      %v639 = vpack.c.bf16 %v616, %v615
      %v640 = vpack.c.bf16 %v618, %v617
      %v641 = vpack.c.bf16 %v620, %v619
      %v642 = vpack.c.bf16 %v622, %v621
      %v643 = vpack.c.bf16 %v624, %v623
      %v644 = vpack.c.bf16 %v626, %v625
      %v645 = vpack.c.bf16 %v628, %v627
      %v646 = vpack.c.bf16 %v630, %v629
      %v663 = vunpack.c.l.b16 %v631
      %v664 = vunpack.c.h.b16 %v631
      %v665 = vunpack.c.l.b16 %v632
      %v666 = vunpack.c.h.b16 %v632
      %v667 = vunpack.c.l.b16 %v633
      %v668 = vunpack.c.h.b16 %v633
      %v669 = vunpack.c.l.b16 %v634
      %v670 = vunpack.c.h.b16 %v634
      %v671 = vunpack.c.l.b16 %v635
      %v672 = vunpack.c.h.b16 %v635
      %v673 = vunpack.c.l.b16 %v636
      %v674 = vunpack.c.h.b16 %v636
      %v675 = vunpack.c.l.b16 %v637
      %v676 = vunpack.c.h.b16 %v637
      %v677 = vunpack.c.l.b16 %v638
      %v678 = vunpack.c.h.b16 %v638
      %v679 = vunpack.c.l.b16 %v639
      %v680 = vunpack.c.h.b16 %v639
      %v681 = vunpack.c.l.b16 %v640
      %v682 = vunpack.c.h.b16 %v640
      %v683 = vunpack.c.l.b16 %v641
      %v684 = vunpack.c.h.b16 %v641
      %v685 = vunpack.c.l.b16 %v642
      %v686 = vunpack.c.h.b16 %v642
      %v687 = vunpack.c.l.b16 %v643
      %v688 = vunpack.c.h.b16 %v643
      %v689 = vunpack.c.l.b16 %v644
      %v690 = vunpack.c.h.b16 %v644
      %v691 = vunpack.c.l.b16 %v645
      %v692 = vunpack.c.h.b16 %v645
      %v693 = vunpack.c.l.b16 %v646
      %v694 = vunpack.c.h.b16 %v646
      %v695 = vpack.c.b16 %v663, %v663
      %v696 = vpack.c.b16 %v664, %v664
      %v697 = vpack.c.b16 %v665, %v665
      %v698 = vpack.c.b16 %v666, %v666
      %v699 = vpack.c.b16 %v667, %v667
      %v700 = vpack.c.b16 %v668, %v668
      %v701 = vpack.c.b16 %v669, %v669
      %v702 = vpack.c.b16 %v670, %v670
      %v703 = vpack.c.b16 %v671, %v671
      %v704 = vpack.c.b16 %v672, %v672
      %v705 = vpack.c.b16 %v673, %v673
      %v706 = vpack.c.b16 %v674, %v674
      %v707 = vpack.c.b16 %v675, %v675
      %v708 = vpack.c.b16 %v676, %v676
      %v709 = vpack.c.b16 %v677, %v677
      %v710 = vpack.c.b16 %v678, %v678
      %v711 = vpack.c.b16 %v679, %v679
      %v712 = vpack.c.b16 %v680, %v680
      %v713 = vpack.c.b16 %v681, %v681
      %v714 = vpack.c.b16 %v682, %v682
      %v715 = vpack.c.b16 %v683, %v683
      %v716 = vpack.c.b16 %v684, %v684
      %v717 = vpack.c.b16 %v685, %v685
      %v718 = vpack.c.b16 %v686, %v686
      %v719 = vpack.c.b16 %v687, %v687
      %v720 = vpack.c.b16 %v688, %v688
      %v721 = vpack.c.b16 %v689, %v689
      %v722 = vpack.c.b16 %v690, %v690
      %v723 = vpack.c.b16 %v691, %v691
      %v724 = vpack.c.b16 %v692, %v692
      %v725 = vpack.c.b16 %v693, %v693
      %v726 = vpack.c.b16 %v694, %v694
      %vm759 = vcmask 125952
      %760 = vst.msk [vmem:[%s172] sm:$0xf] %vm759, %v695
      %761 = vst.msk [vmem:[%s172 + $0x4] sm:$0xf] %vm759, %v696
      %762 = vst.msk [vmem:[%s172 + $0x8] sm:$0xf] %vm759, %v697
      %763 = vst.msk [vmem:[%s172 + $0xc] sm:$0xf] %vm759, %v698
      %764 = vst.msk [vmem:[%s172 + $0x10] sm:$0xf] %vm759, %v699
      %765 = vst.msk [vmem:[%s172 + $0x14] sm:$0xf] %vm759, %v700
      %766 = vst.msk [vmem:[%s172 + $0x18] sm:$0xf] %vm759, %v701
      %767 = vst.msk [vmem:[%s172 + $0x1c] sm:$0xf] %vm759, %v702
      %768 = vst.msk [vmem:[%s172 + $0x20] sm:$0xf] %vm759, %v703
      %769 = vst.msk [vmem:[%s172 + $0x24] sm:$0xf] %vm759, %v704
      %770 = vst.msk [vmem:[%s172 + $0x28] sm:$0xf] %vm759, %v705
      %771 = vst.msk [vmem:[%s172 + $0x2c] sm:$0xf] %vm759, %v706
      %772 = vst.msk [vmem:[%s172 + $0x30] sm:$0xf] %vm759, %v707
      %773 = vst.msk [vmem:[%s172 + $0x34] sm:$0xf] %vm759, %v708
      %774 = vst.msk [vmem:[%s172 + $0x38] sm:$0xf] %vm759, %v709
      %775 = vst.msk [vmem:[%s172 + $0x3c] sm:$0xf] %vm759, %v710
      %776 = vst.msk [vmem:[%s172 + $0x40] sm:$0xf] %vm759, %v711
      %777 = vst.msk [vmem:[%s172 + $0x44] sm:$0xf] %vm759, %v712
      %778 = vst.msk [vmem:[%s172 + $0x48] sm:$0xf] %vm759, %v713
      %779 = vst.msk [vmem:[%s172 + $0x4c] sm:$0xf] %vm759, %v714
      %780 = vst.msk [vmem:[%s172 + $0x50] sm:$0xf] %vm759, %v715
      %781 = vst.msk [vmem:[%s172 + $0x54] sm:$0xf] %vm759, %v716
      %782 = vst.msk [vmem:[%s172 + $0x58] sm:$0xf] %vm759, %v717
      %783 = vst.msk [vmem:[%s172 + $0x5c] sm:$0xf] %vm759, %v718
      %784 = vst.msk [vmem:[%s172 + $0x60] sm:$0xf] %vm759, %v719
      %785 = vst.msk [vmem:[%s172 + $0x64] sm:$0xf] %vm759, %v720
      %786 = vst.msk [vmem:[%s172 + $0x68] sm:$0xf] %vm759, %v721
      %787 = vst.msk [vmem:[%s172 + $0x6c] sm:$0xf] %vm759, %v722
      %788 = vst.msk [vmem:[%s172 + $0x70] sm:$0xf] %vm759, %v723
      %789 = vst.msk [vmem:[%s172 + $0x74] sm:$0xf] %vm759, %v724
      %790 = vst.msk [vmem:[%s172 + $0x78] sm:$0xf] %vm759, %v725
      %791 = vst.msk [vmem:[%s172 + $0x7c] sm:$0xf] %vm759, %v726
      %s792 = smul.u32 32, %s14
      %p793 = scmp.lt.s32.totalorder %s792, 63
      %s794 = scalar_select %p793, %s792, 63
      %s795 = smul.addr %s794, 4
      %s796 = scalar_lea.vmem %s3, %s795
      // Predicated region
      $region33: #{s4gan_discriminator_forward.4} parent=31 // pred_check
        %p797 = pneg %p100
      $region34: #{s4gan_discriminator_forward.4} parent=31 // pred_check_branch
        %799 = sbr.rel (%p797) target = $region36
      $region35: #{s4gan_discriminator_forward.4} parent=31 // pred_region
        %s800 = smul.u32 32, %s14
      $region36: #{s4gan_discriminator_forward.4} parent=31 // pred_fallthru
        _
    $region32: #{s4gan_discriminator_forward.4} parent=5 // pred_fallthru
      _
    %p801 = scmp.le.s32.totalorder 2, %s9
    // Predicated region
    $region37: #{s4gan_discriminator_forward.4} parent=5 // pred_check
      %p802 = pneg %p801
    $region38: #{s4gan_discriminator_forward.4} parent=5 // pred_check_branch
      %804 = sbr.rel (%p802) target = $region40
    $region39: #{s4gan_discriminator_forward.4} parent=5 // pred_region
      %s805 = ssub.s32 %s9, 2
      // Predicated region
      $region41: #{s4gan_discriminator_forward.4} parent=39 // pred_check
        %p806 = pneg %p106
      $region42: #{s4gan_discriminator_forward.4} parent=39 // pred_check_branch
        %808 = sbr.rel (%p806) target = $region44
      $region43: #{s4gan_discriminator_forward.4} parent=39 // pred_region
        %s809 = smul.u32 32, %s15
        %p810 = scmp.lt.s32.totalorder %s809, 63
        %s811 = scalar_select %p810, %s809, 63
        %s812 = smul.addr %s811, 4
        %s813 = scalar_lea.vmem %s3, %s812
      $region44: #{s4gan_discriminator_forward.4} parent=39 // pred_fallthru
        _
    $region40: #{s4gan_discriminator_forward.4} parent=5 // pred_fallthru
      _
  $region6: #{s4gan_discriminator_forward.4} parent=0 // loop_footer
    %s13 = sadd.s32 1, %s9
  $region7: #{s4gan_discriminator_forward.4} parent=0 // loop_footer_branch
    %8 = sbr.rel target = $region3
  $region8: #{s4gan_discriminator_forward.4} parent=0 // loop_exit
    _

// kernel: s4gan_discriminator_forward.5
$region0: #{s4gan_discriminator_forward.5}
  #allocation0 [shape = 'u32[]', space=smem, size = 0x4, offset = 0x4, fixed_abs, tag = 'smem constant byte address 0x4 - core index']
  #allocation1 [shape = 'u32[144,128]{1,0:T(1,128)}', space=vmem, size = 0x12000, scoped, tag = 'internal scratch']
  %s0 = inlined_call_operand.vmem [shape: bf16[128,256], index: 0, kind: input, shape index: {}]
  %s1 = inlined_call_operand.vmem [shape: bf16[256,32], index: 1, kind: input, shape index: {}]
  %s2 = inlined_call_operand.vmem [shape: f32[1,32], index: 2, kind: input, shape index: {}]
  %s3 = inlined_call_operand.vmem [shape: bf16[128,32], index: 3, kind: output, shape index: {}]
  %s4 = sld [smem:[#allocation0]]
  $region45: #{s4gan_discriminator_forward.5} parent=0
    _
  %s6 = ssub.s32 1, %s4
  %s7 = scalar_select 0, %s6, %s4
  loop: start=0, step=1, limit=4
  $region2: #{s4gan_discriminator_forward.5} parent=0 // loop_pre_header
    _
  $region3: #{s4gan_discriminator_forward.5} parent=0 // loop_header
    %s9 = sphi 0, %s13
    %p10 = scmp.ge.s32.totalorder %s9, 4
    %s19 = sphi 0, %s21
    %s22 = sphi 0, %s19
    %s23 = sphi 0, %s22
    %s39 = sphi 0, %s23
    %s43 = sphi 0, %s43
    %s45 = sphi 0, %s43
    %s46 = sphi 0, %s45
    %s60 = sphi 0, %s46
    %s64 = sphi 0, %s64
    %s66 = sphi 0, %s64
    %s67 = sphi 0, %s66
    %s81 = sphi 0, %s67
    %s87 = sphi 0, %s89
    %s90 = sphi 0, %s87
    %s91 = sphi 0, %s90
    %s107 = sphi 0, %s91
  $region4: #{s4gan_discriminator_forward.5} parent=0 // loop_header_branch
    %12 = sbr.rel (%p10) target = $region8
  $region5: #{s4gan_discriminator_forward.5} parent=0 // loop_body
    %s14 = ssub.s32 %s9, 1
    %s15 = ssub.s32 %s9, 2
    %s16 = sadd.s32 %s9, 1
    %s17 = ssub.s32 %s9, %s16
    %p18 = scmp.eq.s32.totalorder %s17, 0
    %s20 = sadd.s32 %s19, 1
    %s21 = scalar_select %p18, %s19, %s20
    %p24 = pneg %p18
    %p25 = scmp.eq.s32.totalorder %s9, 1
    %p26 = por %p24, %p25
    %p27 = scmp.ne.s32.totalorder %s19, %s22
    %p28 = scmp.eq.s32.totalorder %s9, 0
    %p29 = por %p27, %p28
    %p30 = scmp.ne.s32.totalorder %s19, %s22
    %p31 = scmp.eq.s32.totalorder %s14, 1
    %p32 = por %p30, %p31
    %p33 = scmp.ne.s32.totalorder %s22, %s23
    %p34 = scmp.eq.s32.totalorder %s14, 0
    %p35 = por %p33, %p34
    %p36 = scmp.ne.s32.totalorder %s22, %s23
    %p37 = scmp.eq.s32.totalorder %s15, 1
    %p38 = por %p36, %p37
    %p40 = scmp.ne.s32.totalorder %s23, %s39
    %p41 = scmp.eq.s32.totalorder %s15, 0
    %p42 = por %p40, %p41
    %s44 = sadd.s32 %s43, 1
    %p47 = scmp.eq.s32.totalorder %s9, 1
    %p48 = scmp.ne.s32.totalorder %s43, %s45
    %p49 = scmp.eq.s32.totalorder %s9, 0
    %p50 = por %p48, %p49
    %p51 = scmp.ne.s32.totalorder %s43, %s45
    %p52 = scmp.eq.s32.totalorder %s14, 1
    %p53 = por %p51, %p52
    %p54 = scmp.ne.s32.totalorder %s45, %s46
    %p55 = scmp.eq.s32.totalorder %s14, 0
    %p56 = por %p54, %p55
    %p57 = scmp.ne.s32.totalorder %s45, %s46
    %p58 = scmp.eq.s32.totalorder %s15, 1
    %p59 = por %p57, %p58
    %p61 = scmp.ne.s32.totalorder %s46, %s60
    %p62 = scmp.eq.s32.totalorder %s15, 0
    %p63 = por %p61, %p62
    %s65 = sadd.s32 %s64, 1
    %p68 = scmp.eq.s32.totalorder %s9, 1
    %p69 = scmp.ne.s32.totalorder %s64, %s66
    %p70 = scmp.eq.s32.totalorder %s9, 0
    %p71 = por %p69, %p70
    %p72 = scmp.ne.s32.totalorder %s64, %s66
    %p73 = scmp.eq.s32.totalorder %s14, 1
    %p74 = por %p72, %p73
    %p75 = scmp.ne.s32.totalorder %s66, %s67
    %p76 = scmp.eq.s32.totalorder %s14, 0
    %p77 = por %p75, %p76
    %p78 = scmp.ne.s32.totalorder %s66, %s67
    %p79 = scmp.eq.s32.totalorder %s15, 1
    %p80 = por %p78, %p79
    %p82 = scmp.ne.s32.totalorder %s67, %s81
    %p83 = scmp.eq.s32.totalorder %s15, 0
    %p84 = por %p82, %p83
    %s85 = ssub.s32 %s9, %s16
    %p86 = scmp.eq.s32.totalorder %s85, 0
    %s88 = sadd.s32 %s87, 1
    %s89 = scalar_select %p86, %s87, %s88
    %p92 = pneg %p86
    %p93 = scmp.eq.s32.totalorder %s9, 1
    %p94 = por %p92, %p93
    %p95 = scmp.ne.s32.totalorder %s87, %s90
    %p96 = scmp.eq.s32.totalorder %s9, 0
    %p97 = por %p95, %p96
    %p98 = scmp.ne.s32.totalorder %s87, %s90
    %p99 = scmp.eq.s32.totalorder %s14, 1
    %p100 = por %p98, %p99
    %p101 = scmp.ne.s32.totalorder %s90, %s91
    %p102 = scmp.eq.s32.totalorder %s14, 0
    %p103 = por %p101, %p102
    %p104 = scmp.ne.s32.totalorder %s90, %s91
    %p105 = scmp.eq.s32.totalorder %s15, 1
    %p106 = por %p104, %p105
    %p108 = scmp.ne.s32.totalorder %s91, %s107
    %p109 = scmp.eq.s32.totalorder %s15, 0
    %p110 = por %p108, %p109
    %p111 = scmp.le.s32.totalorder 1, %s9
    %p112 = scmp.lt.s32.totalorder %s9, 3
    %p113 = pnand %p111, %p112
    %p114 = pneg %p113
    // Predicated region
    $region9: #{s4gan_discriminator_forward.5} parent=5 // pred_check
      _
    $region10: #{s4gan_discriminator_forward.5} parent=5 // pred_check_branch
      %116 = sbr.rel (%p113) target = $region12
    $region11: #{s4gan_discriminator_forward.5} parent=5 // pred_region
      %s117 = ssub.s32 %s9, 1
      // Predicated region
      $region13: #{s4gan_discriminator_forward.5} parent=11 // pred_check
        %p118 = pneg %p56
      $region14: #{s4gan_discriminator_forward.5} parent=11 // pred_check_branch
        %120 = sbr.rel (%p118) target = $region16
      $region15: #{s4gan_discriminator_forward.5} parent=11 // pred_region
        _
      $region16: #{s4gan_discriminator_forward.5} parent=11 // pred_fallthru
        _
      // Predicated region
      $region17: #{s4gan_discriminator_forward.5} parent=11 // pred_check
        %p121 = pneg %p77
      $region18: #{s4gan_discriminator_forward.5} parent=11 // pred_check_branch
        %123 = sbr.rel (%p121) target = $region20
      $region19: #{s4gan_discriminator_forward.5} parent=11 // pred_region
        _
      $region20: #{s4gan_discriminator_forward.5} parent=11 // pred_fallthru
        _
    $region12: #{s4gan_discriminator_forward.5} parent=5 // pred_fallthru
      _
    %p124 = scmp.lt.s32.totalorder %s9, 2
    // Predicated region
    $region21: #{s4gan_discriminator_forward.5} parent=5 // pred_check
      %p125 = pneg %p124
    $region22: #{s4gan_discriminator_forward.5} parent=5 // pred_check_branch
      %127 = sbr.rel (%p125) target = $region24
    $region23: #{s4gan_discriminator_forward.5} parent=5 // pred_region
      // Predicated region
      $region25: #{s4gan_discriminator_forward.5} parent=23 // pred_check
        %p128 = pneg %p29
      $region26: #{s4gan_discriminator_forward.5} parent=23 // pred_check_branch
        %130 = sbr.rel (%p128) target = $region28
      $region27: #{s4gan_discriminator_forward.5} parent=23 // pred_region
        %s131 = smul.u32 8, %s9
        %p132 = scmp.lt.s32.totalorder %s131, 15
        %s133 = scalar_select %p132, %s131, 15
        %s134 = smul.addr %s133, 2
        %s135 = smul.addr %s134, 4
        %s136 = scalar_lea.vmem %s0, %s135
        %s137 = smul.u32 8, %s9
      $region28: #{s4gan_discriminator_forward.5} parent=23 // pred_fallthru
        _
    $region24: #{s4gan_discriminator_forward.5} parent=5 // pred_fallthru
      _
    %p138 = scmp.le.s32.totalorder 1, %s9
    %p139 = scmp.lt.s32.totalorder %s9, 3
    %p140 = pnand %p138, %p139
    %p141 = pneg %p140
    // Predicated region
    $region29: #{s4gan_discriminator_forward.5} parent=5 // pred_check
      _
    $region30: #{s4gan_discriminator_forward.5} parent=5 // pred_check_branch
      %143 = sbr.rel (%p140) target = $region32
    $region31: #{s4gan_discriminator_forward.5} parent=5 // pred_region
      %s144 = ssub.s32 %s9, 1
      %s145 = smul.u32 8, %s14
      %p146 = scmp.lt.s32.totalorder %s145, 15
      %s147 = scalar_select %p146, %s145, 15
      %s148 = smul.addr %s147, 2
      %s149 = smul.addr %s148, 4
      %s150 = scalar_lea.vmem %s0, %s149
      %p151 = pneg %p35
      %p152 = pneg %p32
      %p153 = pneg %p56
      %p154 = pneg %p53
      %p155 = pneg %p77
      %p156 = pneg %p74
      %p157 = pneg %p103
      %p158 = pneg %p100
      %s159 = smul.u32 8, %s14
      %p160 = scmp.lt.s32.totalorder %s159, 15
      %s161 = scalar_select %p160, %s159, 15
      %s162 = smul.addr %s161, 4
      %s163 = scalar_lea.vmem %s3, %s162
      %s164 = smul.u32 8, %s14
      %p165 = scmp.lt.s32.totalorder %s164, 15
      %s166 = scalar_select %p165, %s164, 15
      %s167 = smul.addr %s166, 2
      %s168 = smul.addr %s167, 4
      %s169 = scalar_lea.vmem %s0, %s168
      %s170 = smul.u32 8, %s14
      %s171 = smul.u32 8, %s14
      %p172 = scmp.lt.s32.totalorder %s171, 15
      %s173 = scalar_select %p172, %s171, 15
      %s174 = smul.addr %s173, 4
      %s175 = scalar_lea.vmem %s3, %s174
      %s176 = smul.u32 8, %s14
      %v178 = vld [vmem:[%s169] sm:$0xff]
      %v179 = vld [vmem:[%s169 + $0x8] sm:$0xff]
      %v180 = vld [vmem:[%s169 + $0x10] sm:$0xff]
      %v181 = vld [vmem:[%s169 + $0x18] sm:$0xff]
      %v182 = vld [vmem:[%s169 + $0x20] sm:$0xff]
      %v183 = vld [vmem:[%s169 + $0x28] sm:$0xff]
      %v184 = vld [vmem:[%s169 + $0x30] sm:$0xff]
      %v185 = vld [vmem:[%s169 + $0x38] sm:$0xff]
      %v186 = vld [vmem:[%s1] sm:$0xf]
      %v187 = vld [vmem:[%s1 + $0x4] sm:$0xf]
      %v188 = vld [vmem:[%s1 + $0x8] sm:$0xf]
      %v189 = vld [vmem:[%s1 + $0xc] sm:$0xf]
      %v190 = vld [vmem:[%s1 + $0x10] sm:$0xf]
      %v191 = vld [vmem:[%s1 + $0x14] sm:$0xf]
      %v192 = vld [vmem:[%s1 + $0x18] sm:$0xf]
      %v193 = vld [vmem:[%s1 + $0x1c] sm:$0xf]
      %v194 = vld [vmem:[%s1 + $0x20] sm:$0xf]
      %v195 = vld [vmem:[%s1 + $0x24] sm:$0xf]
      %v196 = vld [vmem:[%s1 + $0x28] sm:$0xf]
      %v197 = vld [vmem:[%s1 + $0x2c] sm:$0xf]
      %v198 = vld [vmem:[%s1 + $0x30] sm:$0xf]
      %v199 = vld [vmem:[%s1 + $0x34] sm:$0xf]
      %v200 = vld [vmem:[%s1 + $0x38] sm:$0xf]
      %v201 = vld [vmem:[%s1 + $0x3c] sm:$0xf]
      %v202 = vld [vmem:[%s1 + $0x40] sm:$0xf]
      %v203 = vld [vmem:[%s1 + $0x44] sm:$0xf]
      %v204 = vld [vmem:[%s1 + $0x48] sm:$0xf]
      %v205 = vld [vmem:[%s1 + $0x4c] sm:$0xf]
      %v206 = vld [vmem:[%s1 + $0x50] sm:$0xf]
      %v207 = vld [vmem:[%s1 + $0x54] sm:$0xf]
      %v208 = vld [vmem:[%s1 + $0x58] sm:$0xf]
      %v209 = vld [vmem:[%s1 + $0x5c] sm:$0xf]
      %v210 = vld [vmem:[%s1 + $0x60] sm:$0xf]
      %v211 = vld [vmem:[%s1 + $0x64] sm:$0xf]
      %v212 = vld [vmem:[%s1 + $0x68] sm:$0xf]
      %v213 = vld [vmem:[%s1 + $0x6c] sm:$0xf]
      %v214 = vld [vmem:[%s1 + $0x70] sm:$0xf]
      %v215 = vld [vmem:[%s1 + $0x74] sm:$0xf]
      %v216 = vld [vmem:[%s1 + $0x78] sm:$0xf]
      %v217 = vld [vmem:[%s1 + $0x7c] sm:$0xf]
      %v218 = vld [vmem:[%s2] sm:$0x1]
      %v220 = vlaneseq
      %v221 = vshrl.u32 %v220, 7
      %v222 = vsub.s32 0, %v221
      %v223 = vrot.slane %v218, %v222
      %v233 = vunpack.c.l.b16 %v178
      %v234 = vunpack.c.h.b16 %v178
      %v235 = vunpack.c.l.b16 %v179
      %v236 = vunpack.c.h.b16 %v179
      %v237 = vunpack.c.l.b16 %v180
      %v238 = vunpack.c.h.b16 %v180
      %v239 = vunpack.c.l.b16 %v181
      %v240 = vunpack.c.h.b16 %v181
      %v241 = vunpack.c.l.b16 %v182
      %v242 = vunpack.c.h.b16 %v182
      %v243 = vunpack.c.l.b16 %v183
      %v244 = vunpack.c.h.b16 %v183
      %v245 = vunpack.c.l.b16 %v184
      %v246 = vunpack.c.h.b16 %v184
      %v247 = vunpack.c.l.b16 %v185
      %v248 = vunpack.c.h.b16 %v185
      %v249 = vpack.c.b16 %v235, %v233
      %v250 = vpack.c.b16 %v236, %v234
      %v251 = vpack.c.b16 %v239, %v237
      %v252 = vpack.c.b16 %v240, %v238
      %v253 = vpack.c.b16 %v243, %v241
      %v254 = vpack.c.b16 %v244, %v242
      %v255 = vpack.c.b16 %v247, %v245
      %v256 = vpack.c.b16 %v248, %v246
      %v297 = vunpack.c.l.b16 %v186
      %v298 = vunpack.c.l.b16 %v187
      %v299 = vunpack.c.l.b16 %v188
      %v300 = vunpack.c.l.b16 %v189
      %v301 = vunpack.c.l.b16 %v190
      %v302 = vunpack.c.l.b16 %v191
      %v303 = vunpack.c.l.b16 %v192
      %v304 = vunpack.c.l.b16 %v193
      %v305 = vunpack.c.l.b16 %v194
      %v306 = vunpack.c.l.b16 %v195
      %v307 = vunpack.c.l.b16 %v196
      %v308 = vunpack.c.l.b16 %v197
      %v309 = vunpack.c.l.b16 %v198
      %v310 = vunpack.c.l.b16 %v199
      %v311 = vunpack.c.l.b16 %v200
      %v312 = vunpack.c.l.b16 %v201
      %v313 = vunpack.c.l.b16 %v202
      %v314 = vunpack.c.l.b16 %v203
      %v315 = vunpack.c.l.b16 %v204
      %v316 = vunpack.c.l.b16 %v205
      %v317 = vunpack.c.l.b16 %v206
      %v318 = vunpack.c.l.b16 %v207
      %v319 = vunpack.c.l.b16 %v208
      %v320 = vunpack.c.l.b16 %v209
      %v321 = vunpack.c.l.b16 %v210
      %v322 = vunpack.c.l.b16 %v211
      %v323 = vunpack.c.l.b16 %v212
      %v324 = vunpack.c.l.b16 %v213
      %v325 = vunpack.c.l.b16 %v214
      %v326 = vunpack.c.l.b16 %v215
      %v327 = vunpack.c.l.b16 %v216
      %v328 = vunpack.c.l.b16 %v217
      %v329 = vpack.c.b16 %v298, %v297
      %v330 = vpack.c.b16 %v300, %v299
      %v331 = vpack.c.b16 %v302, %v301
      %v332 = vpack.c.b16 %v304, %v303
      %v333 = vpack.c.b16 %v306, %v305
      %v334 = vpack.c.b16 %v308, %v307
      %v335 = vpack.c.b16 %v310, %v309
      %v336 = vpack.c.b16 %v312, %v311
      %v337 = vpack.c.b16 %v314, %v313
      %v338 = vpack.c.b16 %v316, %v315
      %v339 = vpack.c.b16 %v318, %v317
      %v340 = vpack.c.b16 %v320, %v319
      %v341 = vpack.c.b16 %v322, %v321
      %v342 = vpack.c.b16 %v324, %v323
      %v343 = vpack.c.b16 %v326, %v325
      %v344 = vpack.c.b16 %v328, %v327
      %361 = vmatprep.subr.bf16.mxu0 0
      %362 = vmatpush1.bf16.msra.mxu0 %v329
      %363 = vmatprep.subr.bf16.mxu0 0
      %364 = vmatpush1.bf16.msra.mxu0 %v330
      %365 = vmatprep.subr.bf16.mxu0 0
      %366 = vmatpush1.bf16.msra.mxu0 %v331
      %367 = vmatprep.subr.bf16.mxu0 0
      %368 = vmatpush1.bf16.msra.mxu0 %v332
      %369 = vmatprep.subr.bf16.mxu0 0
      %370 = vmatpush1.bf16.msra.mxu0 %v333
      %371 = vmatprep.subr.bf16.mxu0 0
      %372 = vmatpush1.bf16.msra.mxu0 %v334
      %373 = vmatprep.subr.bf16.mxu0 0
      %374 = vmatpush1.bf16.msra.mxu0 %v335
      %375 = vmatprep.subr.bf16.mxu0 0
      %376 = vmatpush1.bf16.msra.mxu0 %v336
      %377 = vmatprep.subr.bf16.mxu0 0
      %378 = vmatpush1.bf16.msra.mxu0 %v337
      %379 = vmatprep.subr.bf16.mxu0 0
      %380 = vmatpush1.bf16.msra.mxu0 %v338
      %381 = vmatprep.subr.bf16.mxu0 0
      %382 = vmatpush1.bf16.msra.mxu0 %v339
      %383 = vmatprep.subr.bf16.mxu0 0
      %384 = vmatpush1.bf16.msra.mxu0 %v340
      %385 = vmatprep.subr.bf16.mxu0 0
      %386 = vmatpush1.bf16.msra.mxu0 %v341
      %387 = vmatprep.subr.bf16.mxu0 0
      %388 = vmatpush1.bf16.msra.mxu0 %v342
      %389 = vmatprep.subr.bf16.mxu0 0
      %390 = vmatpush1.bf16.msra.mxu0 %v343
      %391 = vmatprep.subr.bf16.mxu0 0
      %392 = vmatpush1.bf16.msra.mxu0 %v344
      %393 = vmatprep.mubr.bf16.mxu0 %v250
      %394 = vmatmul.mubr.bf16.gmra.mrb[0].mxu0 %v249
      %v395 = vpop.f32.mrb[0].mxu0
      %v396 = vadd.f32 %v223, %v395
      %v397 = vpop.f32.mrb[0].mxu0
      %v398 = vpop.f32.mrb[0].mxu0
      %v399 = vadd.f32 %v223, %v398
      %v400 = vpop.f32.mrb[0].mxu0
      %401 = vmatprep.mubr.bf16.mxu0 %v252
      %402 = vmatmul.mubr.bf16.gmra.mrb[0].mxu0 %v251
      %v403 = vpop.f32.mrb[0].mxu0
      %v404 = vadd.f32 %v223, %v403
      %v405 = vpop.f32.mrb[0].mxu0
      %v406 = vpop.f32.mrb[0].mxu0
      %v407 = vadd.f32 %v223, %v406
      %v408 = vpop.f32.mrb[0].mxu0
      %409 = vmatprep.mubr.bf16.mxu0 %v254
      %410 = vmatmul.mubr.bf16.gmra.mrb[0].mxu0 %v253
      %v411 = vpop.f32.mrb[0].mxu0
      %v412 = vadd.f32 %v223, %v411
      %v413 = vpop.f32.mrb[0].mxu0
      %v414 = vpop.f32.mrb[0].mxu0
      %v415 = vadd.f32 %v223, %v414
      %v416 = vpop.f32.mrb[0].mxu0
      %417 = vmatprep.mubr.bf16.mxu0 %v256
      %418 = vmatmul.mubr.bf16.gmra.mrb[0].mxu0 %v255
      %v419 = vpop.f32.mrb[0].mxu0
      %v420 = vadd.f32 %v223, %v419
      %v421 = vpop.f32.mrb[0].mxu0
      %v422 = vpop.f32.mrb[0].mxu0
      %v423 = vadd.f32 %v223, %v422
      %v424 = vpop.f32.mrb[0].mxu0
      %425 = vdwg.mxu0
      %vm426 = vcmp.gt.f32.partialorder %v396, 0.0
      %vm427 = vcmp.gt.f32.partialorder %v399, 0.0
      %vm428 = vcmp.gt.f32.partialorder %v404, 0.0
      %vm429 = vcmp.gt.f32.partialorder %v407, 0.0
      %vm430 = vcmp.gt.f32.partialorder %v412, 0.0
      %vm431 = vcmp.gt.f32.partialorder %v415, 0.0
      %vm432 = vcmp.gt.f32.partialorder %v420, 0.0
      %vm433 = vcmp.gt.f32.partialorder %v423, 0.0
      %v434 = vmul.f32 %v396, 0.2
      %v435 = vmul.f32 %v399, 0.2
      %v436 = vmul.f32 %v404, 0.2
      %v437 = vmul.f32 %v407, 0.2
      %v438 = vmul.f32 %v412, 0.2
      %v439 = vmul.f32 %v415, 0.2
      %v440 = vmul.f32 %v420, 0.2
      %v441 = vmul.f32 %v423, 0.2
      %v442 = vsel %vm426, %v396, %v434
      %v443 = vsel %vm427, %v399, %v435
      %v444 = vsel %vm428, %v404, %v436
      %v445 = vsel %vm429, %v407, %v437
      %v446 = vsel %vm430, %v412, %v438
      %v447 = vsel %vm431, %v415, %v439
      %v448 = vsel %vm432, %v420, %v440
      %v449 = vsel %vm433, %v423, %v441
      %v450 = vpack.c.bf16 %v443, %v442
      %v451 = vpack.c.bf16 %v445, %v444
      %v452 = vpack.c.bf16 %v447, %v446
      %v453 = vpack.c.bf16 %v449, %v448
      %v458 = vunpack.c.l.b16 %v450
      %v459 = vunpack.c.h.b16 %v450
      %v460 = vunpack.c.l.b16 %v451
      %v461 = vunpack.c.h.b16 %v451
      %v462 = vunpack.c.l.b16 %v452
      %v463 = vunpack.c.h.b16 %v452
      %v464 = vunpack.c.l.b16 %v453
      %v465 = vunpack.c.h.b16 %v453
      %v466 = vpack.c.b16 %v458, %v458
      %v467 = vpack.c.b16 %v459, %v459
      %v468 = vpack.c.b16 %v460, %v460
      %v469 = vpack.c.b16 %v461, %v461
      %v470 = vpack.c.b16 %v462, %v462
      %v471 = vpack.c.b16 %v463, %v463
      %v472 = vpack.c.b16 %v464, %v464
      %v473 = vpack.c.b16 %v465, %v465
      %vm482 = vcmask 257024
      %483 = vst.msk [vmem:[%s175] sm:$0xf] %vm482, %v466
      %484 = vst.msk [vmem:[%s175 + $0x4] sm:$0xf] %vm482, %v467
      %485 = vst.msk [vmem:[%s175 + $0x8] sm:$0xf] %vm482, %v468
      %486 = vst.msk [vmem:[%s175 + $0xc] sm:$0xf] %vm482, %v469
      %487 = vst.msk [vmem:[%s175 + $0x10] sm:$0xf] %vm482, %v470
      %488 = vst.msk [vmem:[%s175 + $0x14] sm:$0xf] %vm482, %v471
      %489 = vst.msk [vmem:[%s175 + $0x18] sm:$0xf] %vm482, %v472
      %490 = vst.msk [vmem:[%s175 + $0x1c] sm:$0xf] %vm482, %v473
      %s491 = smul.u32 8, %s14
      %p492 = scmp.lt.s32.totalorder %s491, 15
      %s493 = scalar_select %p492, %s491, 15
      %s494 = smul.addr %s493, 4
      %s495 = scalar_lea.vmem %s3, %s494
      // Predicated region
      $region33: #{s4gan_discriminator_forward.5} parent=31 // pred_check
        %p496 = pneg %p100
      $region34: #{s4gan_discriminator_forward.5} parent=31 // pred_check_branch
        %498 = sbr.rel (%p496) target = $region36
      $region35: #{s4gan_discriminator_forward.5} parent=31 // pred_region
        %s499 = smul.u32 8, %s14
      $region36: #{s4gan_discriminator_forward.5} parent=31 // pred_fallthru
        _
    $region32: #{s4gan_discriminator_forward.5} parent=5 // pred_fallthru
      _
    %p500 = scmp.le.s32.totalorder 2, %s9
    // Predicated region
    $region37: #{s4gan_discriminator_forward.5} parent=5 // pred_check
      %p501 = pneg %p500
    $region38: #{s4gan_discriminator_forward.5} parent=5 // pred_check_branch
      %503 = sbr.rel (%p501) target = $region40
    $region39: #{s4gan_discriminator_forward.5} parent=5 // pred_region
      %s504 = ssub.s32 %s9, 2
      // Predicated region
      $region41: #{s4gan_discriminator_forward.5} parent=39 // pred_check
        %p505 = pneg %p106
      $region42: #{s4gan_discriminator_forward.5} parent=39 // pred_check_branch
        %507 = sbr.rel (%p505) target = $region44
      $region43: #{s4gan_discriminator_forward.5} parent=39 // pred_region
        %s508 = smul.u32 8, %s15
        %p509 = scmp.lt.s32.totalorder %s508, 15
        %s510 = scalar_select %p509, %s508, 15
        %s511 = smul.addr %s510, 4
        %s512 = scalar_lea.vmem %s3, %s511
      $region44: #{s4gan_discriminator_forward.5} parent=39 // pred_fallthru
        _
    $region40: #{s4gan_discriminator_forward.5} parent=5 // pred_fallthru
      _
  $region6: #{s4gan_discriminator_forward.5} parent=0 // loop_footer
    %s13 = sadd.s32 1, %s9
  $region7: #{s4gan_discriminator_forward.5} parent=0 // loop_footer_branch
    %8 = sbr.rel target = $region3
  $region8: #{s4gan_discriminator_forward.5} parent=0 // loop_exit
    _

// kernel: s4gan_discriminator_forward.6
$region0: #{s4gan_discriminator_forward.6}
  #allocation0 [shape = 'u32[]', space=smem, size = 0x4, offset = 0x4, fixed_abs, tag = 'smem constant byte address 0x4 - core index']
  #allocation1 [shape = 'u32[144,128]{1,0:T(1,128)}', space=vmem, size = 0x12000, scoped, tag = 'internal scratch']
  %s0 = inlined_call_operand.vmem [shape: bf16[32,512], index: 0, kind: input, shape index: {}]
  %s1 = inlined_call_operand.vmem [shape: bf16[512,64], index: 1, kind: input, shape index: {}]
  %s2 = inlined_call_operand.vmem [shape: f32[1,64], index: 2, kind: input, shape index: {}]
  %s3 = inlined_call_operand.vmem [shape: bf16[32,64], index: 3, kind: output, shape index: {}]
  %s4 = sld [smem:[#allocation0]]
  $region45: #{s4gan_discriminator_forward.6} parent=0
    _
  %s6 = ssub.s32 1, %s4
  %s7 = scalar_select 0, %s6, %s4
  loop: start=0, step=1, limit=4
  $region2: #{s4gan_discriminator_forward.6} parent=0 // loop_pre_header
    _
  $region3: #{s4gan_discriminator_forward.6} parent=0 // loop_header
    %s9 = sphi 0, %s13
    %p10 = scmp.ge.s32.totalorder %s9, 4
    %s19 = sphi 0, %s21
    %s22 = sphi 0, %s19
    %s23 = sphi 0, %s22
    %s39 = sphi 0, %s23
    %s43 = sphi 0, %s43
    %s45 = sphi 0, %s43
    %s46 = sphi 0, %s45
    %s60 = sphi 0, %s46
    %s64 = sphi 0, %s64
    %s66 = sphi 0, %s64
    %s67 = sphi 0, %s66
    %s81 = sphi 0, %s67
    %s87 = sphi 0, %s89
    %s90 = sphi 0, %s87
    %s91 = sphi 0, %s90
    %s107 = sphi 0, %s91
  $region4: #{s4gan_discriminator_forward.6} parent=0 // loop_header_branch
    %12 = sbr.rel (%p10) target = $region8
  $region5: #{s4gan_discriminator_forward.6} parent=0 // loop_body
    %s14 = ssub.s32 %s9, 1
    %s15 = ssub.s32 %s9, 2
    %s16 = sadd.s32 %s9, 1
    %s17 = ssub.s32 %s9, %s16
    %p18 = scmp.eq.s32.totalorder %s17, 0
    %s20 = sadd.s32 %s19, 1
    %s21 = scalar_select %p18, %s19, %s20
    %p24 = pneg %p18
    %p25 = scmp.eq.s32.totalorder %s9, 1
    %p26 = por %p24, %p25
    %p27 = scmp.ne.s32.totalorder %s19, %s22
    %p28 = scmp.eq.s32.totalorder %s9, 0
    %p29 = por %p27, %p28
    %p30 = scmp.ne.s32.totalorder %s19, %s22
    %p31 = scmp.eq.s32.totalorder %s14, 1
    %p32 = por %p30, %p31
    %p33 = scmp.ne.s32.totalorder %s22, %s23
    %p34 = scmp.eq.s32.totalorder %s14, 0
    %p35 = por %p33, %p34
    %p36 = scmp.ne.s32.totalorder %s22, %s23
    %p37 = scmp.eq.s32.totalorder %s15, 1
    %p38 = por %p36, %p37
    %p40 = scmp.ne.s32.totalorder %s23, %s39
    %p41 = scmp.eq.s32.totalorder %s15, 0
    %p42 = por %p40, %p41
    %s44 = sadd.s32 %s43, 1
    %p47 = scmp.eq.s32.totalorder %s9, 1
    %p48 = scmp.ne.s32.totalorder %s43, %s45
    %p49 = scmp.eq.s32.totalorder %s9, 0
    %p50 = por %p48, %p49
    %p51 = scmp.ne.s32.totalorder %s43, %s45
    %p52 = scmp.eq.s32.totalorder %s14, 1
    %p53 = por %p51, %p52
    %p54 = scmp.ne.s32.totalorder %s45, %s46
    %p55 = scmp.eq.s32.totalorder %s14, 0
    %p56 = por %p54, %p55
    %p57 = scmp.ne.s32.totalorder %s45, %s46
    %p58 = scmp.eq.s32.totalorder %s15, 1
    %p59 = por %p57, %p58
    %p61 = scmp.ne.s32.totalorder %s46, %s60
    %p62 = scmp.eq.s32.totalorder %s15, 0
    %p63 = por %p61, %p62
    %s65 = sadd.s32 %s64, 1
    %p68 = scmp.eq.s32.totalorder %s9, 1
    %p69 = scmp.ne.s32.totalorder %s64, %s66
    %p70 = scmp.eq.s32.totalorder %s9, 0
    %p71 = por %p69, %p70
    %p72 = scmp.ne.s32.totalorder %s64, %s66
    %p73 = scmp.eq.s32.totalorder %s14, 1
    %p74 = por %p72, %p73
    %p75 = scmp.ne.s32.totalorder %s66, %s67
    %p76 = scmp.eq.s32.totalorder %s14, 0
    %p77 = por %p75, %p76
    %p78 = scmp.ne.s32.totalorder %s66, %s67
    %p79 = scmp.eq.s32.totalorder %s15, 1
    %p80 = por %p78, %p79
    %p82 = scmp.ne.s32.totalorder %s67, %s81
    %p83 = scmp.eq.s32.totalorder %s15, 0
    %p84 = por %p82, %p83
    %s85 = ssub.s32 %s9, %s16
    %p86 = scmp.eq.s32.totalorder %s85, 0
    %s88 = sadd.s32 %s87, 1
    %s89 = scalar_select %p86, %s87, %s88
    %p92 = pneg %p86
    %p93 = scmp.eq.s32.totalorder %s9, 1
    %p94 = por %p92, %p93
    %p95 = scmp.ne.s32.totalorder %s87, %s90
    %p96 = scmp.eq.s32.totalorder %s9, 0
    %p97 = por %p95, %p96
    %p98 = scmp.ne.s32.totalorder %s87, %s90
    %p99 = scmp.eq.s32.totalorder %s14, 1
    %p100 = por %p98, %p99
    %p101 = scmp.ne.s32.totalorder %s90, %s91
    %p102 = scmp.eq.s32.totalorder %s14, 0
    %p103 = por %p101, %p102
    %p104 = scmp.ne.s32.totalorder %s90, %s91
    %p105 = scmp.eq.s32.totalorder %s15, 1
    %p106 = por %p104, %p105
    %p108 = scmp.ne.s32.totalorder %s91, %s107
    %p109 = scmp.eq.s32.totalorder %s15, 0
    %p110 = por %p108, %p109
    %p111 = scmp.le.s32.totalorder 1, %s9
    %p112 = scmp.lt.s32.totalorder %s9, 3
    %p113 = pnand %p111, %p112
    %p114 = pneg %p113
    // Predicated region
    $region9: #{s4gan_discriminator_forward.6} parent=5 // pred_check
      _
    $region10: #{s4gan_discriminator_forward.6} parent=5 // pred_check_branch
      %116 = sbr.rel (%p113) target = $region12
    $region11: #{s4gan_discriminator_forward.6} parent=5 // pred_region
      %s117 = ssub.s32 %s9, 1
      // Predicated region
      $region13: #{s4gan_discriminator_forward.6} parent=11 // pred_check
        %p118 = pneg %p56
      $region14: #{s4gan_discriminator_forward.6} parent=11 // pred_check_branch
        %120 = sbr.rel (%p118) target = $region16
      $region15: #{s4gan_discriminator_forward.6} parent=11 // pred_region
        _
      $region16: #{s4gan_discriminator_forward.6} parent=11 // pred_fallthru
        _
      // Predicated region
      $region17: #{s4gan_discriminator_forward.6} parent=11 // pred_check
        %p121 = pneg %p77
      $region18: #{s4gan_discriminator_forward.6} parent=11 // pred_check_branch
        %123 = sbr.rel (%p121) target = $region20
      $region19: #{s4gan_discriminator_forward.6} parent=11 // pred_region
        _
      $region20: #{s4gan_discriminator_forward.6} parent=11 // pred_fallthru
        _
    $region12: #{s4gan_discriminator_forward.6} parent=5 // pred_fallthru
      _
    %p124 = scmp.lt.s32.totalorder %s9, 2
    // Predicated region
    $region21: #{s4gan_discriminator_forward.6} parent=5 // pred_check
      %p125 = pneg %p124
    $region22: #{s4gan_discriminator_forward.6} parent=5 // pred_check_branch
      %127 = sbr.rel (%p125) target = $region24
    $region23: #{s4gan_discriminator_forward.6} parent=5 // pred_region
      // Predicated region
      $region25: #{s4gan_discriminator_forward.6} parent=23 // pred_check
        %p128 = pneg %p29
      $region26: #{s4gan_discriminator_forward.6} parent=23 // pred_check_branch
        %130 = sbr.rel (%p128) target = $region28
      $region27: #{s4gan_discriminator_forward.6} parent=23 // pred_region
        %s131 = smul.u32 2, %s9
        %p132 = scmp.lt.s32.totalorder %s131, 3
        %s133 = scalar_select %p132, %s131, 3
        %s134 = smul.addr %s133, 4
        %s135 = smul.addr %s134, 4
        %s136 = scalar_lea.vmem %s0, %s135
        %s137 = smul.u32 2, %s9
      $region28: #{s4gan_discriminator_forward.6} parent=23 // pred_fallthru
        _
    $region24: #{s4gan_discriminator_forward.6} parent=5 // pred_fallthru
      _
    %p138 = scmp.le.s32.totalorder 1, %s9
    %p139 = scmp.lt.s32.totalorder %s9, 3
    %p140 = pnand %p138, %p139
    %p141 = pneg %p140
    // Predicated region
    $region29: #{s4gan_discriminator_forward.6} parent=5 // pred_check
      _
    $region30: #{s4gan_discriminator_forward.6} parent=5 // pred_check_branch
      %143 = sbr.rel (%p140) target = $region32
    $region31: #{s4gan_discriminator_forward.6} parent=5 // pred_region
      %s144 = ssub.s32 %s9, 1
      %s145 = smul.u32 2, %s14
      %p146 = scmp.lt.s32.totalorder %s145, 3
      %s147 = scalar_select %p146, %s145, 3
      %s148 = smul.addr %s147, 4
      %s149 = smul.addr %s148, 4
      %s150 = scalar_lea.vmem %s0, %s149
      %p151 = pneg %p35
      %p152 = pneg %p32
      %p153 = pneg %p56
      %p154 = pneg %p53
      %p155 = pneg %p77
      %p156 = pneg %p74
      %p157 = pneg %p103
      %p158 = pneg %p100
      %s159 = smul.u32 2, %s14
      %p160 = scmp.lt.s32.totalorder %s159, 3
      %s161 = scalar_select %p160, %s159, 3
      %s162 = smul.addr %s161, 4
      %s163 = scalar_lea.vmem %s3, %s162
      %s164 = smul.u32 2, %s14
      %p165 = scmp.lt.s32.totalorder %s164, 3
      %s166 = scalar_select %p165, %s164, 3
      %s167 = smul.addr %s166, 4
      %s168 = smul.addr %s167, 4
      %s169 = scalar_lea.vmem %s0, %s168
      %s170 = smul.u32 2, %s14
      %s171 = smul.u32 2, %s14
      %p172 = scmp.lt.s32.totalorder %s171, 3
      %s173 = scalar_select %p172, %s171, 3
      %s174 = smul.addr %s173, 4
      %s175 = scalar_lea.vmem %s3, %s174
      %s176 = smul.u32 2, %s14
      %v178 = vld [vmem:[%s169] sm:$0xff]
      %v179 = vld [vmem:[%s169 + $0x8] sm:$0xff]
      %v180 = vld [vmem:[%s169 + $0x10] sm:$0xff]
      %v181 = vld [vmem:[%s169 + $0x18] sm:$0xff]
      %v182 = vld [vmem:[%s1] sm:$0xf]
      %v183 = vld [vmem:[%s1 + $0x4] sm:$0xf]
      %v184 = vld [vmem:[%s1 + $0x8] sm:$0xf]
      %v185 = vld [vmem:[%s1 + $0xc] sm:$0xf]
      %v186 = vld [vmem:[%s1 + $0x10] sm:$0xf]
      %v187 = vld [vmem:[%s1 + $0x14] sm:$0xf]
      %v188 = vld [vmem:[%s1 + $0x18] sm:$0xf]
      %v189 = vld [vmem:[%s1 + $0x1c] sm:$0xf]
      %v190 = vld [vmem:[%s1 + $0x20] sm:$0xf]
      %v191 = vld [vmem:[%s1 + $0x24] sm:$0xf]
      %v192 = vld [vmem:[%s1 + $0x28] sm:$0xf]
      %v193 = vld [vmem:[%s1 + $0x2c] sm:$0xf]
      %v194 = vld [vmem:[%s1 + $0x30] sm:$0xf]
      %v195 = vld [vmem:[%s1 + $0x34] sm:$0xf]
      %v196 = vld [vmem:[%s1 + $0x38] sm:$0xf]
      %v197 = vld [vmem:[%s1 + $0x3c] sm:$0xf]
      %v198 = vld [vmem:[%s1 + $0x40] sm:$0xf]
      %v199 = vld [vmem:[%s1 + $0x44] sm:$0xf]
      %v200 = vld [vmem:[%s1 + $0x48] sm:$0xf]
      %v201 = vld [vmem:[%s1 + $0x4c] sm:$0xf]
      %v202 = vld [vmem:[%s1 + $0x50] sm:$0xf]
      %v203 = vld [vmem:[%s1 + $0x54] sm:$0xf]
      %v204 = vld [vmem:[%s1 + $0x58] sm:$0xf]
      %v205 = vld [vmem:[%s1 + $0x5c] sm:$0xf]
      %v206 = vld [vmem:[%s1 + $0x60] sm:$0xf]
      %v207 = vld [vmem:[%s1 + $0x64] sm:$0xf]
      %v208 = vld [vmem:[%s1 + $0x68] sm:$0xf]
      %v209 = vld [vmem:[%s1 + $0x6c] sm:$0xf]
      %v210 = vld [vmem:[%s1 + $0x70] sm:$0xf]
      %v211 = vld [vmem:[%s1 + $0x74] sm:$0xf]
      %v212 = vld [vmem:[%s1 + $0x78] sm:$0xf]
      %v213 = vld [vmem:[%s1 + $0x7c] sm:$0xf]
      %v214 = vld [vmem:[%s1 + $0x80] sm:$0xf]
      %v215 = vld [vmem:[%s1 + $0x84] sm:$0xf]
      %v216 = vld [vmem:[%s1 + $0x88] sm:$0xf]
      %v217 = vld [vmem:[%s1 + $0x8c] sm:$0xf]
      %v218 = vld [vmem:[%s1 + $0x90] sm:$0xf]
      %v219 = vld [vmem:[%s1 + $0x94] sm:$0xf]
      %v220 = vld [vmem:[%s1 + $0x98] sm:$0xf]
      %v221 = vld [vmem:[%s1 + $0x9c] sm:$0xf]
      %v222 = vld [vmem:[%s1 + $0xa0] sm:$0xf]
      %v223 = vld [vmem:[%s1 + $0xa4] sm:$0xf]
      %v224 = vld [vmem:[%s1 + $0xa8] sm:$0xf]
      %v225 = vld [vmem:[%s1 + $0xac] sm:$0xf]
      %v226 = vld [vmem:[%s1 + $0xb0] sm:$0xf]
      %v227 = vld [vmem:[%s1 + $0xb4] sm:$0xf]
      %v228 = vld [vmem:[%s1 + $0xb8] sm:$0xf]
      %v229 = vld [vmem:[%s1 + $0xbc] sm:$0xf]
      %v230 = vld [vmem:[%s1 + $0xc0] sm:$0xf]
      %v231 = vld [vmem:[%s1 + $0xc4] sm:$0xf]
      %v232 = vld [vmem:[%s1 + $0xc8] sm:$0xf]
      %v233 = vld [vmem:[%s1 + $0xcc] sm:$0xf]
      %v234 = vld [vmem:[%s1 + $0xd0] sm:$0xf]
      %v235 = vld [vmem:[%s1 + $0xd4] sm:$0xf]
      %v236 = vld [vmem:[%s1 + $0xd8] sm:$0xf]
      %v237 = vld [vmem:[%s1 + $0xdc] sm:$0xf]
      %v238 = vld [vmem:[%s1 + $0xe0] sm:$0xf]
      %v239 = vld [vmem:[%s1 + $0xe4] sm:$0xf]
      %v240 = vld [vmem:[%s1 + $0xe8] sm:$0xf]
      %v241 = vld [vmem:[%s1 + $0xec] sm:$0xf]
      %v242 = vld [vmem:[%s1 + $0xf0] sm:$0xf]
      %v243 = vld [vmem:[%s1 + $0xf4] sm:$0xf]
      %v244 = vld [vmem:[%s1 + $0xf8] sm:$0xf]
      %v245 = vld [vmem:[%s1 + $0xfc] sm:$0xf]
      %v246 = vld [vmem:[%s2] sm:$0x1]
      %v248 = vlaneseq
      %v249 = vshrl.u32 %v248, 7
      %v250 = vsub.s32 0, %v249
      %v251 = vrot.slane %v246, %v250
      %v257 = vunpack.c.l.b16 %v178
      %v258 = vunpack.c.h.b16 %v178
      %v259 = vunpack.c.l.b16 %v179
      %v260 = vunpack.c.h.b16 %v179
      %v261 = vunpack.c.l.b16 %v180
      %v262 = vunpack.c.h.b16 %v180
      %v263 = vunpack.c.l.b16 %v181
      %v264 = vunpack.c.h.b16 %v181
      %v265 = vpack.c.b16 %v261, %v257
      %v266 = vpack.c.b16 %v262, %v258
      %v267 = vpack.c.b16 %v263, %v259
      %v268 = vpack.c.b16 %v264, %v260
      %v337 = vunpack.c.l.b16 %v182
      %v338 = vunpack.c.l.b16 %v183
      %v339 = vunpack.c.l.b16 %v184
      %v340 = vunpack.c.l.b16 %v185
      %v341 = vunpack.c.l.b16 %v186
      %v342 = vunpack.c.l.b16 %v187
      %v343 = vunpack.c.l.b16 %v188
      %v344 = vunpack.c.l.b16 %v189
      %v345 = vunpack.c.l.b16 %v190
      %v346 = vunpack.c.l.b16 %v191
      %v347 = vunpack.c.l.b16 %v192
      %v348 = vunpack.c.l.b16 %v193
      %v349 = vunpack.c.l.b16 %v194
      %v350 = vunpack.c.l.b16 %v195
      %v351 = vunpack.c.l.b16 %v196
      %v352 = vunpack.c.l.b16 %v197
      %v353 = vunpack.c.l.b16 %v198
      %v354 = vunpack.c.l.b16 %v199
      %v355 = vunpack.c.l.b16 %v200
      %v356 = vunpack.c.l.b16 %v201
      %v357 = vunpack.c.l.b16 %v202
      %v358 = vunpack.c.l.b16 %v203
      %v359 = vunpack.c.l.b16 %v204
      %v360 = vunpack.c.l.b16 %v205
      %v361 = vunpack.c.l.b16 %v206
      %v362 = vunpack.c.l.b16 %v207
      %v363 = vunpack.c.l.b16 %v208
      %v364 = vunpack.c.l.b16 %v209
      %v365 = vunpack.c.l.b16 %v210
      %v366 = vunpack.c.l.b16 %v211
      %v367 = vunpack.c.l.b16 %v212
      %v368 = vunpack.c.l.b16 %v213
      %v369 = vunpack.c.l.b16 %v214
      %v370 = vunpack.c.l.b16 %v215
      %v371 = vunpack.c.l.b16 %v216
      %v372 = vunpack.c.l.b16 %v217
      %v373 = vunpack.c.l.b16 %v218
      %v374 = vunpack.c.l.b16 %v219
      %v375 = vunpack.c.l.b16 %v220
      %v376 = vunpack.c.l.b16 %v221
      %v377 = vunpack.c.l.b16 %v222
      %v378 = vunpack.c.l.b16 %v223
      %v379 = vunpack.c.l.b16 %v224
      %v380 = vunpack.c.l.b16 %v225
      %v381 = vunpack.c.l.b16 %v226
      %v382 = vunpack.c.l.b16 %v227
      %v383 = vunpack.c.l.b16 %v228
      %v384 = vunpack.c.l.b16 %v229
      %v385 = vunpack.c.l.b16 %v230
      %v386 = vunpack.c.l.b16 %v231
      %v387 = vunpack.c.l.b16 %v232
      %v388 = vunpack.c.l.b16 %v233
      %v389 = vunpack.c.l.b16 %v234
      %v390 = vunpack.c.l.b16 %v235
      %v391 = vunpack.c.l.b16 %v236
      %v392 = vunpack.c.l.b16 %v237
      %v393 = vunpack.c.l.b16 %v238
      %v394 = vunpack.c.l.b16 %v239
      %v395 = vunpack.c.l.b16 %v240
      %v396 = vunpack.c.l.b16 %v241
      %v397 = vunpack.c.l.b16 %v242
      %v398 = vunpack.c.l.b16 %v243
      %v399 = vunpack.c.l.b16 %v244
      %v400 = vunpack.c.l.b16 %v245
      %v401 = vpack.c.b16 %v338, %v337
      %v402 = vpack.c.b16 %v340, %v339
      %v403 = vpack.c.b16 %v342, %v341
      %v404 = vpack.c.b16 %v344, %v343
      %v405 = vpack.c.b16 %v346, %v345
      %v406 = vpack.c.b16 %v348, %v347
      %v407 = vpack.c.b16 %v350, %v349
      %v408 = vpack.c.b16 %v352, %v351
      %v409 = vpack.c.b16 %v354, %v353
      %v410 = vpack.c.b16 %v356, %v355
      %v411 = vpack.c.b16 %v358, %v357
      %v412 = vpack.c.b16 %v360, %v359
      %v413 = vpack.c.b16 %v362, %v361
      %v414 = vpack.c.b16 %v364, %v363
      %v415 = vpack.c.b16 %v366, %v365
      %v416 = vpack.c.b16 %v368, %v367
      %v417 = vpack.c.b16 %v370, %v369
      %v418 = vpack.c.b16 %v372, %v371
      %v419 = vpack.c.b16 %v374, %v373
      %v420 = vpack.c.b16 %v376, %v375
      %v421 = vpack.c.b16 %v378, %v377
      %v422 = vpack.c.b16 %v380, %v379
      %v423 = vpack.c.b16 %v382, %v381
      %v424 = vpack.c.b16 %v384, %v383
      %v425 = vpack.c.b16 %v386, %v385
      %v426 = vpack.c.b16 %v388, %v387
      %v427 = vpack.c.b16 %v390, %v389
      %v428 = vpack.c.b16 %v392, %v391
      %v429 = vpack.c.b16 %v394, %v393
      %v430 = vpack.c.b16 %v396, %v395
      %v431 = vpack.c.b16 %v398, %v397
      %v432 = vpack.c.b16 %v400, %v399
      %465 = vmatprep.subr.bf16.mxu0 0
      %466 = vmatpush1.bf16.msra.mxu0 %v401
      %467 = vmatprep.subr.bf16.mxu0 0
      %468 = vmatpush1.bf16.msra.mxu0 %v402
      %469 = vmatprep.subr.bf16.mxu0 0
      %470 = vmatpush1.bf16.msra.mxu0 %v403
      %471 = vmatprep.subr.bf16.mxu0 0
      %472 = vmatpush1.bf16.msra.mxu0 %v404
      %473 = vmatprep.subr.bf16.mxu0 0
      %474 = vmatpush1.bf16.msra.mxu0 %v405
      %475 = vmatprep.subr.bf16.mxu0 0
      %476 = vmatpush1.bf16.msra.mxu0 %v406
      %477 = vmatprep.subr.bf16.mxu0 0
      %478 = vmatpush1.bf16.msra.mxu0 %v407
      %479 = vmatprep.subr.bf16.mxu0 0
      %480 = vmatpush1.bf16.msra.mxu0 %v408
      %481 = vmatprep.subr.bf16.mxu0 0
      %482 = vmatpush1.bf16.msra.mxu0 %v409
      %483 = vmatprep.subr.bf16.mxu0 0
      %484 = vmatpush1.bf16.msra.mxu0 %v410
      %485 = vmatprep.subr.bf16.mxu0 0
      %486 = vmatpush1.bf16.msra.mxu0 %v411
      %487 = vmatprep.subr.bf16.mxu0 0
      %488 = vmatpush1.bf16.msra.mxu0 %v412
      %489 = vmatprep.subr.bf16.mxu0 0
      %490 = vmatpush1.bf16.msra.mxu0 %v413
      %491 = vmatprep.subr.bf16.mxu0 0
      %492 = vmatpush1.bf16.msra.mxu0 %v414
      %493 = vmatprep.subr.bf16.mxu0 0
      %494 = vmatpush1.bf16.msra.mxu0 %v415
      %495 = vmatprep.subr.bf16.mxu0 0
      %496 = vmatpush1.bf16.msra.mxu0 %v416
      %497 = vmatprep.mubr.bf16.mxu0 %v266
      %498 = vmatmul.mubr.bf16.gmra.mrb[0].mxu0 %v265
      %v499 = vpop.f32.mrb[0].mxu0
      %v500 = vadd.f32 %v251, %v499
      %v501 = vpop.f32.mrb[0].mxu0
      %v502 = vpop.f32.mrb[0].mxu0
      %v503 = vadd.f32 %v251, %v502
      %v504 = vpop.f32.mrb[0].mxu0
      %505 = vdwg.mxu0
      %506 = vmatprep.subr.bf16.mxu0 0
      %507 = vmatpush1.bf16.msra.mxu0 %v417
      %508 = vmatprep.subr.bf16.mxu0 0
      %509 = vmatpush1.bf16.msra.mxu0 %v418
      %510 = vmatprep.subr.bf16.mxu0 0
      %511 = vmatpush1.bf16.msra.mxu0 %v419
      %512 = vmatprep.subr.bf16.mxu0 0
      %513 = vmatpush1.bf16.msra.mxu0 %v420
      %514 = vmatprep.subr.bf16.mxu0 0
      %515 = vmatpush1.bf16.msra.mxu0 %v421
      %516 = vmatprep.subr.bf16.mxu0 0
      %517 = vmatpush1.bf16.msra.mxu0 %v422
      %518 = vmatprep.subr.bf16.mxu0 0
      %519 = vmatpush1.bf16.msra.mxu0 %v423
      %520 = vmatprep.subr.bf16.mxu0 0
      %521 = vmatpush1.bf16.msra.mxu0 %v424
      %522 = vmatprep.subr.bf16.mxu0 0
      %523 = vmatpush1.bf16.msra.mxu0 %v425
      %524 = vmatprep.subr.bf16.mxu0 0
      %525 = vmatpush1.bf16.msra.mxu0 %v426
      %526 = vmatprep.subr.bf16.mxu0 0
      %527 = vmatpush1.bf16.msra.mxu0 %v427
      %528 = vmatprep.subr.bf16.mxu0 0
      %529 = vmatpush1.bf16.msra.mxu0 %v428
      %530 = vmatprep.subr.bf16.mxu0 0
      %531 = vmatpush1.bf16.msra.mxu0 %v429
      %532 = vmatprep.subr.bf16.mxu0 0
      %533 = vmatpush1.bf16.msra.mxu0 %v430
      %534 = vmatprep.subr.bf16.mxu0 0
      %535 = vmatpush1.bf16.msra.mxu0 %v431
      %536 = vmatprep.subr.bf16.mxu0 0
      %537 = vmatpush1.bf16.msra.mxu0 %v432
      %538 = vmatprep.mubr.bf16.mxu0 %v268
      %539 = vmatmul.mubr.bf16.gmra.mrb[0].mxu0 %v267
      %v540 = vpop.f32.mrb[0].mxu0
      %v541 = vadd.f32 %v500, %v540
      %v542 = vpop.f32.mrb[0].mxu0
      %v543 = vpop.f32.mrb[0].mxu0
      %v544 = vadd.f32 %v503, %v543
      %v545 = vpop.f32.mrb[0].mxu0
      %546 = vdwg.mxu0
      %vm547 = vcmp.gt.f32.partialorder %v541, 0.0
      %vm548 = vcmp.gt.f32.partialorder %v544, 0.0
      %v549 = vmul.f32 %v541, 0.2
      %v550 = vmul.f32 %v544, 0.2
      %v551 = vsel %vm547, %v541, %v549
      %v552 = vsel %vm548, %v544, %v550
      %v553 = vpack.c.bf16 %v552, %v551
      %v555 = vunpack.c.l.b16 %v553
      %v556 = vunpack.c.h.b16 %v553
      %v557 = vpack.c.b16 %v555, %v555
      %v558 = vpack.c.b16 %v556, %v556
      %vm561 = vcmask 519168
      %562 = vst.msk [vmem:[%s175] sm:$0xf] %vm561, %v557
      %563 = vst.msk [vmem:[%s175 + $0x4] sm:$0xf] %vm561, %v558
      %s564 = smul.u32 2, %s14
      %p565 = scmp.lt.s32.totalorder %s564, 3
      %s566 = scalar_select %p565, %s564, 3
      %s567 = smul.addr %s566, 4
      %s568 = scalar_lea.vmem %s3, %s567
      // Predicated region
      $region33: #{s4gan_discriminator_forward.6} parent=31 // pred_check
        %p569 = pneg %p100
      $region34: #{s4gan_discriminator_forward.6} parent=31 // pred_check_branch
        %571 = sbr.rel (%p569) target = $region36
      $region35: #{s4gan_discriminator_forward.6} parent=31 // pred_region
        %s572 = smul.u32 2, %s14
      $region36: #{s4gan_discriminator_forward.6} parent=31 // pred_fallthru
        _
    $region32: #{s4gan_discriminator_forward.6} parent=5 // pred_fallthru
      _
    %p573 = scmp.le.s32.totalorder 2, %s9
    // Predicated region
    $region37: #{s4gan_discriminator_forward.6} parent=5 // pred_check
      %p574 = pneg %p573
    $region38: #{s4gan_discriminator_forward.6} parent=5 // pred_check_branch
      %576 = sbr.rel (%p574) target = $region40
    $region39: #{s4gan_discriminator_forward.6} parent=5 // pred_region
      %s577 = ssub.s32 %s9, 2
      // Predicated region
      $region41: #{s4gan_discriminator_forward.6} parent=39 // pred_check
        %p578 = pneg %p106
      $region42: #{s4gan_discriminator_forward.6} parent=39 // pred_check_branch
        %580 = sbr.rel (%p578) target = $region44
      $region43: #{s4gan_discriminator_forward.6} parent=39 // pred_region
        %s581 = smul.u32 2, %s15
        %p582 = scmp.lt.s32.totalorder %s581, 3
        %s583 = scalar_select %p582, %s581, 3
        %s584 = smul.addr %s583, 4
        %s585 = scalar_lea.vmem %s3, %s584
      $region44: #{s4gan_discriminator_forward.6} parent=39 // pred_fallthru
        _
    $region40: #{s4gan_discriminator_forward.6} parent=5 // pred_fallthru
      _
  $region6: #{s4gan_discriminator_forward.6} parent=0 // loop_footer
    %s13 = sadd.s32 1, %s9
  $region7: #{s4gan_discriminator_forward.6} parent=0 // loop_footer_branch
    %8 = sbr.rel target = $region3
  $region8: #{s4gan_discriminator_forward.6} parent=0 // loop_exit
    _

// kernel: s4gan_discriminator_forward.7
$region0: #{s4gan_discriminator_forward.7}
  #allocation0 [shape = 'u32[]', space=smem, size = 0x4, offset = 0x4, fixed_abs, tag = 'smem constant byte address 0x4 - core index']
  #allocation1 [shape = 'u32[144,128]{1,0:T(1,128)}', space=vmem, size = 0x12000, scoped, tag = 'internal scratch']
  #allocation2 [shape = 'f32[1,1]{1,0:T(1,128)S(1)}', space=vmem, size = 0x200, scoped, tag = 'scoped memory for s4gan_discriminator_forward.7']
  %s0 = inlined_call_operand.vmem [shape: bf16[2,4,1024], index: 0, kind: input, shape index: {}]
  %s1 = inlined_call_operand.vmem [shape: bf16[1024,128], index: 1, kind: input, shape index: {}]
  %s2 = inlined_call_operand.vmem [shape: f32[1,128], index: 2, kind: input, shape index: {}]
  %s3 = inlined_call_operand.vmem [shape: f32[1,128], index: 3, kind: input, shape index: {}]
  %s4 = inlined_call_operand.<no memory space> [shape: f32[1,1], index: 4, kind: input, shape index: {}]
  %s5 = inlined_call_operand.hbm [shape: f32[2,1,128], index: 5, kind: output, shape index: {0}]
  %s6 = inlined_call_operand.vmem [shape: f32[2,1,1], index: 6, kind: output, shape index: {1}]
  %7 = xla_tuple %s5, %s6
  %s8 = sld [smem:[#allocation0]]
  $region73: #{s4gan_discriminator_forward.7} parent=0
    _
  %s10 = ssub.s32 1, %s8
  %s11 = scalar_select 0, %s10, %s8
  %v12 = vstv %s4
  %13 = vst [vmem:[#allocation2] sm:$0x1] %v12
  $region1: #{s4gan_discriminator_forward.7} parent=0
    #allocation3 [shape = 'u8[1024]{0}', space=vmem, size = 0x400, scoped, tag = 'output window, operand 0']
    #allocation4 [shape = 's32[2]{0}', space=sflag, size = 0x8, scoped, tag = 'scoped memory for s4gan_discriminator_forward.7']
    %14 = vsyncpa [#allocation4], 0
    %s15 = scalar_lea.sflag [#allocation4], 1
    %16 = vsyncpa %s15, 0
    loop: start=0, step=1, limit=4
    $region2: #{s4gan_discriminator_forward.7} parent=1 // loop_pre_header
      _
    $region3: #{s4gan_discriminator_forward.7} parent=1 // loop_header
      %s18 = sphi 0, %s22
      %p19 = scmp.ge.s32.totalorder %s18, 4
      %s25 = sphi 0, %s37
      %s26 = sphi 0, %s33
      %s27 = sphi 0, %s25
      %s28 = sphi 0, %s26
      %s29 = sphi 0, %s27
      %s30 = sphi 0, %s28
      %s42 = sphi 0, %s44
      %s45 = sphi 0, %s42
      %s46 = sphi 0, %s45
      %s62 = sphi 0, %s46
      %s66 = sphi 0, %s66
      %s68 = sphi 0, %s66
      %s69 = sphi 0, %s68
      %s83 = sphi 0, %s69
      %s87 = sphi 0, %s87
      %s89 = sphi 0, %s87
      %s90 = sphi 0, %s89
      %s104 = sphi 0, %s90
      %s108 = sphi 0, %s108
      %s110 = sphi 0, %s108
      %s111 = sphi 0, %s110
      %s125 = sphi 0, %s111
      %s129 = sphi 0, %s129
      %s131 = sphi 0, %s129
      %s132 = sphi 0, %s131
      %s146 = sphi 0, %s132
      %s152 = sphi 0, %s154
      %s155 = sphi 0, %s152
      %s156 = sphi 0, %s155
      %s172 = sphi 0, %s156
      %s178 = sphi 0, %s180
      %s181 = sphi 0, %s178
      %s182 = sphi 0, %s181
      %s198 = sphi 0, %s182
    $region4: #{s4gan_discriminator_forward.7} parent=1 // loop_header_branch
      %21 = sbr.rel (%p19) target = $region8
    $region5: #{s4gan_discriminator_forward.7} parent=1 // loop_body
      %s23 = ssub.s32 %s18, 1
      %s24 = ssub.s32 %s18, 2
      %s31 = sadd.s32 1, %s26
      %p32 = scmp.ge.s32.totalorder %s31, 1
      %s33 = scalar_select %p32, 0, %s31
      %s34 = sadd.s32 1, %s25
      %s35 = scalar_select %p32, %s34, %s25
      %p36 = scmp.ge.s32.totalorder %s35, 2
      %s37 = scalar_select %p36, 0, %s35
      %s38 = ssub.s32 %s25, %s37
      %s39 = ssub.s32 %s26, %s33
      %s40 = sor.u32 %s38, %s39
      %p41 = scmp.eq.s32.totalorder %s40, 0
      %s43 = sadd.s32 %s42, 1
      %s44 = scalar_select %p41, %s42, %s43
      %p47 = pneg %p41
      %p48 = scmp.eq.s32.totalorder %s18, 1
      %p49 = por %p47, %p48
      %p50 = scmp.ne.s32.totalorder %s42, %s45
      %p51 = scmp.eq.s32.totalorder %s18, 0
      %p52 = por %p50, %p51
      %p53 = scmp.ne.s32.totalorder %s42, %s45
      %p54 = scmp.eq.s32.totalorder %s23, 1
      %p55 = por %p53, %p54
      %p56 = scmp.ne.s32.totalorder %s45, %s46
      %p57 = scmp.eq.s32.totalorder %s23, 0
      %p58 = por %p56, %p57
      %p59 = scmp.ne.s32.totalorder %s45, %s46
      %p60 = scmp.eq.s32.totalorder %s24, 1
      %p61 = por %p59, %p60
      %p63 = scmp.ne.s32.totalorder %s46, %s62
      %p64 = scmp.eq.s32.totalorder %s24, 0
      %p65 = por %p63, %p64
      %s67 = sadd.s32 %s66, 1
      %p70 = scmp.eq.s32.totalorder %s18, 1
      %p71 = scmp.ne.s32.totalorder %s66, %s68
      %p72 = scmp.eq.s32.totalorder %s18, 0
      %p73 = por %p71, %p72
      %p74 = scmp.ne.s32.totalorder %s66, %s68
      %p75 = scmp.eq.s32.totalorder %s23, 1
      %p76 = por %p74, %p75
      %p77 = scmp.ne.s32.totalorder %s68, %s69
      %p78 = scmp.eq.s32.totalorder %s23, 0
      %p79 = por %p77, %p78
      %p80 = scmp.ne.s32.totalorder %s68, %s69
      %p81 = scmp.eq.s32.totalorder %s24, 1
      %p82 = por %p80, %p81
      %p84 = scmp.ne.s32.totalorder %s69, %s83
      %p85 = scmp.eq.s32.totalorder %s24, 0
      %p86 = por %p84, %p85
      %s88 = sadd.s32 %s87, 1
      %p91 = scmp.eq.s32.totalorder %s18, 1
      %p92 = scmp.ne.s32.totalorder %s87, %s89
      %p93 = scmp.eq.s32.totalorder %s18, 0
      %p94 = por %p92, %p93
      %p95 = scmp.ne.s32.totalorder %s87, %s89
      %p96 = scmp.eq.s32.totalorder %s23, 1
      %p97 = por %p95, %p96
      %p98 = scmp.ne.s32.totalorder %s89, %s90
      %p99 = scmp.eq.s32.totalorder %s23, 0
      %p100 = por %p98, %p99
      %p101 = scmp.ne.s32.totalorder %s89, %s90
      %p102 = scmp.eq.s32.totalorder %s24, 1
      %p103 = por %p101, %p102
      %p105 = scmp.ne.s32.totalorder %s90, %s104
      %p106 = scmp.eq.s32.totalorder %s24, 0
      %p107 = por %p105, %p106
      %s109 = sadd.s32 %s108, 1
      %p112 = scmp.eq.s32.totalorder %s18, 1
      %p113 = scmp.ne.s32.totalorder %s108, %s110
      %p114 = scmp.eq.s32.totalorder %s18, 0
      %p115 = por %p113, %p114
      %p116 = scmp.ne.s32.totalorder %s108, %s110
      %p117 = scmp.eq.s32.totalorder %s23, 1
      %p118 = por %p116, %p117
      %p119 = scmp.ne.s32.totalorder %s110, %s111
      %p120 = scmp.eq.s32.totalorder %s23, 0
      %p121 = por %p119, %p120
      %p122 = scmp.ne.s32.totalorder %s110, %s111
      %p123 = scmp.eq.s32.totalorder %s24, 1
      %p124 = por %p122, %p123
      %p126 = scmp.ne.s32.totalorder %s111, %s125
      %p127 = scmp.eq.s32.totalorder %s24, 0
      %p128 = por %p126, %p127
      %s130 = sadd.s32 %s129, 1
      %p133 = scmp.eq.s32.totalorder %s18, 1
      %p134 = scmp.ne.s32.totalorder %s129, %s131
      %p135 = scmp.eq.s32.totalorder %s18, 0
      %p136 = por %p134, %p135
      %p137 = scmp.ne.s32.totalorder %s129, %s131
      %p138 = scmp.eq.s32.totalorder %s23, 1
      %p139 = por %p137, %p138
      %p140 = scmp.ne.s32.totalorder %s131, %s132
      %p141 = scmp.eq.s32.totalorder %s23, 0
      %p142 = por %p140, %p141
      %p143 = scmp.ne.s32.totalorder %s131, %s132
      %p144 = scmp.eq.s32.totalorder %s24, 1
      %p145 = por %p143, %p144
      %p147 = scmp.ne.s32.totalorder %s132, %s146
      %p148 = scmp.eq.s32.totalorder %s24, 0
      %p149 = por %p147, %p148
      %s150 = ssub.s32 %s25, %s37
      %p151 = scmp.eq.s32.totalorder %s150, 0
      %s153 = sadd.s32 %s152, 1
      %s154 = scalar_select %p151, %s152, %s153
      %p157 = pneg %p151
      %p158 = scmp.eq.s32.totalorder %s18, 1
      %p159 = por %p157, %p158
      %p160 = scmp.ne.s32.totalorder %s152, %s155
      %p161 = scmp.eq.s32.totalorder %s18, 0
      %p162 = por %p160, %p161
      %p163 = scmp.ne.s32.totalorder %s152, %s155
      %p164 = scmp.eq.s32.totalorder %s23, 1
      %p165 = por %p163, %p164
      %p166 = scmp.ne.s32.totalorder %s155, %s156
      %p167 = scmp.eq.s32.totalorder %s23, 0
      %p168 = por %p166, %p167
      %p169 = scmp.ne.s32.totalorder %s155, %s156
      %p170 = scmp.eq.s32.totalorder %s24, 1
      %p171 = por %p169, %p170
      %p173 = scmp.ne.s32.totalorder %s156, %s172
      %p174 = scmp.eq.s32.totalorder %s24, 0
      %p175 = por %p173, %p174
      %s176 = ssub.s32 %s25, %s37
      %p177 = scmp.eq.s32.totalorder %s176, 0
      %s179 = sadd.s32 %s178, 1
      %s180 = scalar_select %p177, %s178, %s179
      %p183 = pneg %p177
      %p184 = scmp.eq.s32.totalorder %s18, 1
      %p185 = por %p183, %p184
      %p186 = scmp.ne.s32.totalorder %s178, %s181
      %p187 = scmp.eq.s32.totalorder %s18, 0
      %p188 = por %p186, %p187
      %p189 = scmp.ne.s32.totalorder %s178, %s181
      %p190 = scmp.eq.s32.totalorder %s23, 1
      %p191 = por %p189, %p190
      %p192 = scmp.ne.s32.totalorder %s181, %s182
      %p193 = scmp.eq.s32.totalorder %s23, 0
      %p194 = por %p192, %p193
      %p195 = scmp.ne.s32.totalorder %s181, %s182
      %p196 = scmp.eq.s32.totalorder %s24, 1
      %p197 = por %p195, %p196
      %p199 = scmp.ne.s32.totalorder %s182, %s198
      %p200 = scmp.eq.s32.totalorder %s24, 0
      %p201 = por %p199, %p200
      %p202 = scmp.le.s32.totalorder 1, %s18
      %p203 = scmp.lt.s32.totalorder %s18, 3
      %p204 = pnand %p202, %p203
      %p205 = pneg %p204
      // Predicated region
      $region9: #{s4gan_discriminator_forward.7} parent=5 // pred_check
        _
      $region10: #{s4gan_discriminator_forward.7} parent=5 // pred_check_branch
        %207 = sbr.rel (%p204) target = $region12
      $region11: #{s4gan_discriminator_forward.7} parent=5 // pred_region
        %s208 = ssub.s32 %s18, 1
        // Predicated region
        $region13: #{s4gan_discriminator_forward.7} parent=11 // pred_check
          %p209 = pneg %p79
        $region14: #{s4gan_discriminator_forward.7} parent=11 // pred_check_branch
          %211 = sbr.rel (%p209) target = $region16
        $region15: #{s4gan_discriminator_forward.7} parent=11 // pred_region
          _
        $region16: #{s4gan_discriminator_forward.7} parent=11 // pred_fallthru
          _
        // Predicated region
        $region17: #{s4gan_discriminator_forward.7} parent=11 // pred_check
          %p212 = pneg %p100
        $region18: #{s4gan_discriminator_forward.7} parent=11 // pred_check_branch
          %214 = sbr.rel (%p212) target = $region20
        $region19: #{s4gan_discriminator_forward.7} parent=11 // pred_region
          _
        $region20: #{s4gan_discriminator_forward.7} parent=11 // pred_fallthru
          _
        // Predicated region
        $region21: #{s4gan_discriminator_forward.7} parent=11 // pred_check
          %p215 = pneg %p121
        $region22: #{s4gan_discriminator_forward.7} parent=11 // pred_check_branch
          %217 = sbr.rel (%p215) target = $region24
        $region23: #{s4gan_discriminator_forward.7} parent=11 // pred_region
          _
        $region24: #{s4gan_discriminator_forward.7} parent=11 // pred_fallthru
          _
        // Predicated region
        $region25: #{s4gan_discriminator_forward.7} parent=11 // pred_check
          %p218 = pneg %p142
        $region26: #{s4gan_discriminator_forward.7} parent=11 // pred_check_branch
          %220 = sbr.rel (%p218) target = $region28
        $region27: #{s4gan_discriminator_forward.7} parent=11 // pred_region
          _
        $region28: #{s4gan_discriminator_forward.7} parent=11 // pred_fallthru
          _
      $region12: #{s4gan_discriminator_forward.7} parent=5 // pred_fallthru
        _
      %p221 = scmp.lt.s32.totalorder %s18, 2
      // Predicated region
      $region29: #{s4gan_discriminator_forward.7} parent=5 // pred_check
        %p222 = pneg %p221
      $region30: #{s4gan_discriminator_forward.7} parent=5 // pred_check_branch
        %224 = sbr.rel (%p222) target = $region32
      $region31: #{s4gan_discriminator_forward.7} parent=5 // pred_region
        // Predicated region
        $region33: #{s4gan_discriminator_forward.7} parent=31 // pred_check
          %p225 = pneg %p52
        $region34: #{s4gan_discriminator_forward.7} parent=31 // pred_check_branch
          %227 = sbr.rel (%p225) target = $region36
        $region35: #{s4gan_discriminator_forward.7} parent=31 // pred_region
          %p228 = scmp.lt.s32.totalorder %s25, 1
          %s229 = scalar_select %p228, %s25, 1
          %p230 = scmp.lt.s32.totalorder %s26, 0
          %s231 = scalar_select %p230, %s26, 0
          %s232 = smul.addr %s231, 8
          %s233 = smul.addr %s229, 8
          %s234 = sadd.s32 %s232, %s233
          %s235 = smul.addr %s234, 2
          %s236 = scalar_lea.vmem %s0, %s235
        $region36: #{s4gan_discriminator_forward.7} parent=31 // pred_fallthru
          _
      $region32: #{s4gan_discriminator_forward.7} parent=5 // pred_fallthru
        _
      %p237 = scmp.le.s32.totalorder 1, %s18
      %p238 = scmp.lt.s32.totalorder %s18, 3
      %p239 = pnand %p237, %p238
      %p240 = pneg %p239
      // Predicated region
      $region37: #{s4gan_discriminator_forward.7} parent=5 // pred_check
        _
      $region38: #{s4gan_discriminator_forward.7} parent=5 // pred_check_branch
        %242 = sbr.rel (%p239) target = $region40
      $region39: #{s4gan_discriminator_forward.7} parent=5 // pred_region
        %s243 = ssub.s32 %s18, 1
        %p244 = scmp.lt.s32.totalorder %s27, 1
        %s245 = scalar_select %p244, %s27, 1
        %p246 = scmp.lt.s32.totalorder %s28, 0
        %s247 = scalar_select %p246, %s28, 0
        %s248 = smul.addr %s247, 8
        %s249 = smul.addr %s245, 8
        %s250 = sadd.s32 %s248, %s249
        %s251 = smul.addr %s250, 2
        %s252 = scalar_lea.vmem %s0, %s251
        %p253 = pneg %p58
        %p254 = pneg %p55
        %p255 = pneg %p79
        %p256 = pneg %p76
        %p257 = pneg %p100
        %p258 = pneg %p97
        %p259 = pneg %p121
        %p260 = pneg %p118
        %p261 = pneg %p142
        %p262 = pneg %p139
        %p263 = pneg %p168
        %p264 = pneg %p165
        %s265 = sand.u32 %s155, 1
        %s266 = scalar_lea.sflag [#allocation4], %s265
        %s267 = sand.u32 %s155, 1
        %s268 = scalar_lea.vmem [#allocation3], %s267
        %p269 = pneg %p194
        %p270 = pneg %p191
        %p271 = scmp.lt.s32.totalorder %s27, 1
        %s272 = scalar_select %p271, %s27, 1
        %s273 = scalar_lea.vmem %s6, %s272
        %p274 = scmp.lt.s32.totalorder %s27, 1
        %s275 = scalar_select %p274, %s27, 1
        %p276 = scmp.lt.s32.totalorder %s28, 0
        %s277 = scalar_select %p276, %s28, 0
        %s278 = smul.addr %s277, 8
        %s279 = smul.addr %s275, 8
        %s280 = sadd.s32 %s278, %s279
        %s281 = smul.addr %s280, 2
        %s282 = scalar_lea.vmem %s0, %s281
        %p283 = scmp.lt.s32.totalorder %s27, 1
        %s284 = scalar_select %p283, %s27, 1
        %s285 = scalar_lea.vmem %s6, %s284
        %v287 = vld [vmem:[%s282] sm:$0xff]
        %v288 = vld [vmem:[%s282 + $0x8] sm:$0xff]
        %v289 = vld [vmem:[%s1] sm:$0xf]
        %v290 = vld [vmem:[%s1 + $0x4] sm:$0xf]
        %v291 = vld [vmem:[%s1 + $0x8] sm:$0xf]
        %v292 = vld [vmem:[%s1 + $0xc] sm:$0xf]
        %v293 = vld [vmem:[%s1 + $0x10] sm:$0xf]
        %v294 = vld [vmem:[%s1 + $0x14] sm:$0xf]
        %v295 = vld [vmem:[%s1 + $0x18] sm:$0xf]
        %v296 = vld [vmem:[%s1 + $0x1c] sm:$0xf]
        %v297 = vld [vmem:[%s1 + $0x20] sm:$0xf]
        %v298 = vld [vmem:[%s1 + $0x24] sm:$0xf]
        %v299 = vld [vmem:[%s1 + $0x28] sm:$0xf]
        %v300 = vld [vmem:[%s1 + $0x2c] sm:$0xf]
        %v301 = vld [vmem:[%s1 + $0x30] sm:$0xf]
        %v302 = vld [vmem:[%s1 + $0x34] sm:$0xf]
        %v303 = vld [vmem:[%s1 + $0x38] sm:$0xf]
        %v304 = vld [vmem:[%s1 + $0x3c] sm:$0xf]
        %v305 = vld [vmem:[%s1 + $0x40] sm:$0xf]
        %v306 = vld [vmem:[%s1 + $0x44] sm:$0xf]
        %v307 = vld [vmem:[%s1 + $0x48] sm:$0xf]
        %v308 = vld [vmem:[%s1 + $0x4c] sm:$0xf]
        %v309 = vld [vmem:[%s1 + $0x50] sm:$0xf]
        %v310 = vld [vmem:[%s1 + $0x54] sm:$0xf]
        %v311 = vld [vmem:[%s1 + $0x58] sm:$0xf]
        %v312 = vld [vmem:[%s1 + $0x5c] sm:$0xf]
        %v313 = vld [vmem:[%s1 + $0x60] sm:$0xf]
        %v314 = vld [vmem:[%s1 + $0x64] sm:$0xf]
        %v315 = vld [vmem:[%s1 + $0x68] sm:$0xf]
        %v316 = vld [vmem:[%s1 + $0x6c] sm:$0xf]
        %v317 = vld [vmem:[%s1 + $0x70] sm:$0xf]
        %v318 = vld [vmem:[%s1 + $0x74] sm:$0xf]
        %v319 = vld [vmem:[%s1 + $0x78] sm:$0xf]
        %v320 = vld [vmem:[%s1 + $0x7c] sm:$0xf]
        %v321 = vld [vmem:[%s1 + $0x80] sm:$0xf]
        %v322 = vld [vmem:[%s1 + $0x84] sm:$0xf]
        %v323 = vld [vmem:[%s1 + $0x88] sm:$0xf]
        %v324 = vld [vmem:[%s1 + $0x8c] sm:$0xf]
        %v325 = vld [vmem:[%s1 + $0x90] sm:$0xf]
        %v326 = vld [vmem:[%s1 + $0x94] sm:$0xf]
        %v327 = vld [vmem:[%s1 + $0x98] sm:$0xf]
        %v328 = vld [vmem:[%s1 + $0x9c] sm:$0xf]
        %v329 = vld [vmem:[%s1 + $0xa0] sm:$0xf]
        %v330 = vld [vmem:[%s1 + $0xa4] sm:$0xf]
        %v331 = vld [vmem:[%s1 + $0xa8] sm:$0xf]
        %v332 = vld [vmem:[%s1 + $0xac] sm:$0xf]
        %v333 = vld [vmem:[%s1 + $0xb0] sm:$0xf]
        %v334 = vld [vmem:[%s1 + $0xb4] sm:$0xf]
        %v335 = vld [vmem:[%s1 + $0xb8] sm:$0xf]
        %v336 = vld [vmem:[%s1 + $0xbc] sm:$0xf]
        %v337 = vld [vmem:[%s1 + $0xc0] sm:$0xf]
        %v338 = vld [vmem:[%s1 + $0xc4] sm:$0xf]
        %v339 = vld [vmem:[%s1 + $0xc8] sm:$0xf]
        %v340 = vld [vmem:[%s1 + $0xcc] sm:$0xf]
        %v341 = vld [vmem:[%s1 + $0xd0] sm:$0xf]
        %v342 = vld [vmem:[%s1 + $0xd4] sm:$0xf]
        %v343 = vld [vmem:[%s1 + $0xd8] sm:$0xf]
        %v344 = vld [vmem:[%s1 + $0xdc] sm:$0xf]
        %v345 = vld [vmem:[%s1 + $0xe0] sm:$0xf]
        %v346 = vld [vmem:[%s1 + $0xe4] sm:$0xf]
        %v347 = vld [vmem:[%s1 + $0xe8] sm:$0xf]
        %v348 = vld [vmem:[%s1 + $0xec] sm:$0xf]
        %v349 = vld [vmem:[%s1 + $0xf0] sm:$0xf]
        %v350 = vld [vmem:[%s1 + $0xf4] sm:$0xf]
        %v351 = vld [vmem:[%s1 + $0xf8] sm:$0xf]
        %v352 = vld [vmem:[%s1 + $0xfc] sm:$0xf]
        %v353 = vld [vmem:[%s1 + $0x100] sm:$0xf]
        %v354 = vld [vmem:[%s1 + $0x104] sm:$0xf]
        %v355 = vld [vmem:[%s1 + $0x108] sm:$0xf]
        %v356 = vld [vmem:[%s1 + $0x10c] sm:$0xf]
        %v357 = vld [vmem:[%s1 + $0x110] sm:$0xf]
        %v358 = vld [vmem:[%s1 + $0x114] sm:$0xf]
        %v359 = vld [vmem:[%s1 + $0x118] sm:$0xf]
        %v360 = vld [vmem:[%s1 + $0x11c] sm:$0xf]
        %v361 = vld [vmem:[%s1 + $0x120] sm:$0xf]
        %v362 = vld [vmem:[%s1 + $0x124] sm:$0xf]
        %v363 = vld [vmem:[%s1 + $0x128] sm:$0xf]
        %v364 = vld [vmem:[%s1 + $0x12c] sm:$0xf]
        %v365 = vld [vmem:[%s1 + $0x130] sm:$0xf]
        %v366 = vld [vmem:[%s1 + $0x134] sm:$0xf]
        %v367 = vld [vmem:[%s1 + $0x138] sm:$0xf]
        %v368 = vld [vmem:[%s1 + $0x13c] sm:$0xf]
        %v369 = vld [vmem:[%s1 + $0x140] sm:$0xf]
        %v370 = vld [vmem:[%s1 + $0x144] sm:$0xf]
        %v371 = vld [vmem:[%s1 + $0x148] sm:$0xf]
        %v372 = vld [vmem:[%s1 + $0x14c] sm:$0xf]
        %v373 = vld [vmem:[%s1 + $0x150] sm:$0xf]
        %v374 = vld [vmem:[%s1 + $0x154] sm:$0xf]
        %v375 = vld [vmem:[%s1 + $0x158] sm:$0xf]
        %v376 = vld [vmem:[%s1 + $0x15c] sm:$0xf]
        %v377 = vld [vmem:[%s1 + $0x160] sm:$0xf]
        %v378 = vld [vmem:[%s1 + $0x164] sm:$0xf]
        %v379 = vld [vmem:[%s1 + $0x168] sm:$0xf]
        %v380 = vld [vmem:[%s1 + $0x16c] sm:$0xf]
        %v381 = vld [vmem:[%s1 + $0x170] sm:$0xf]
        %v382 = vld [vmem:[%s1 + $0x174] sm:$0xf]
        %v383 = vld [vmem:[%s1 + $0x178] sm:$0xf]
        %v384 = vld [vmem:[%s1 + $0x17c] sm:$0xf]
        %v385 = vld [vmem:[%s1 + $0x180] sm:$0xf]
        %v386 = vld [vmem:[%s1 + $0x184] sm:$0xf]
        %v387 = vld [vmem:[%s1 + $0x188] sm:$0xf]
        %v388 = vld [vmem:[%s1 + $0x18c] sm:$0xf]
        %v389 = vld [vmem:[%s1 + $0x190] sm:$0xf]
        %v390 = vld [vmem:[%s1 + $0x194] sm:$0xf]
        %v391 = vld [vmem:[%s1 + $0x198] sm:$0xf]
        %v392 = vld [vmem:[%s1 + $0x19c] sm:$0xf]
        %v393 = vld [vmem:[%s1 + $0x1a0] sm:$0xf]
        %v394 = vld [vmem:[%s1 + $0x1a4] sm:$0xf]
        %v395 = vld [vmem:[%s1 + $0x1a8] sm:$0xf]
        %v396 = vld [vmem:[%s1 + $0x1ac] sm:$0xf]
        %v397 = vld [vmem:[%s1 + $0x1b0] sm:$0xf]
        %v398 = vld [vmem:[%s1 + $0x1b4] sm:$0xf]
        %v399 = vld [vmem:[%s1 + $0x1b8] sm:$0xf]
        %v400 = vld [vmem:[%s1 + $0x1bc] sm:$0xf]
        %v401 = vld [vmem:[%s1 + $0x1c0] sm:$0xf]
        %v402 = vld [vmem:[%s1 + $0x1c4] sm:$0xf]
        %v403 = vld [vmem:[%s1 + $0x1c8] sm:$0xf]
        %v404 = vld [vmem:[%s1 + $0x1cc] sm:$0xf]
        %v405 = vld [vmem:[%s1 + $0x1d0] sm:$0xf]
        %v406 = vld [vmem:[%s1 + $0x1d4] sm:$0xf]
        %v407 = vld [vmem:[%s1 + $0x1d8] sm:$0xf]
        %v408 = vld [vmem:[%s1 + $0x1dc] sm:$0xf]
        %v409 = vld [vmem:[%s1 + $0x1e0] sm:$0xf]
        %v410 = vld [vmem:[%s1 + $0x1e4] sm:$0xf]
        %v411 = vld [vmem:[%s1 + $0x1e8] sm:$0xf]
        %v412 = vld [vmem:[%s1 + $0x1ec] sm:$0xf]
        %v413 = vld [vmem:[%s1 + $0x1f0] sm:$0xf]
        %v414 = vld [vmem:[%s1 + $0x1f4] sm:$0xf]
        %v415 = vld [vmem:[%s1 + $0x1f8] sm:$0xf]
        %v416 = vld [vmem:[%s1 + $0x1fc] sm:$0xf]
        %v417 = vld [vmem:[%s2] sm:$0x1]
        %v419 = vlaneseq
        %v420 = vshrl.u32 %v419, 7
        %v421 = vsub.s32 0, %v420
        %v422 = vrot.slane %v417, %v421
        %v426 = vcombine.high %v287, %v287
        %v428 = vunpack.c.l.s4 1983009808
        %v429 = vunpack.c.0.s8 %v428
        %v430 = vlaneseq
        %v431 = vshrl.u32 %v430, 7
        %v432 = vsub.s32 %v429, %v431
        %v433 = vrot.slane %v287, %v432
        %v435 = vunpack.c.l.s4 1983009808
        %v436 = vunpack.c.0.s8 %v435
        %v437 = vlaneseq
        %v438 = vshrl.u32 %v437, 7
        %v439 = vsub.s32 %v436, %v438
        %v440 = vrot.slane %v426, %v439
        %v441 = vcombine.high %v433, %v433
        %v442 = vcombine.high %v440, %v440
        %v443 = vcombine.high %v288, %v288
        %v445 = vunpack.c.l.s4 1983009808
        %v446 = vunpack.c.0.s8 %v445
        %v447 = vlaneseq
        %v448 = vshrl.u32 %v447, 7
        %v449 = vsub.s32 %v446, %v448
        %v450 = vrot.slane %v288, %v449
        %v452 = vunpack.c.l.s4 1983009808
        %v453 = vunpack.c.0.s8 %v452
        %v454 = vlaneseq
        %v455 = vshrl.u32 %v454, 7
        %v456 = vsub.s32 %v453, %v455
        %v457 = vrot.slane %v443, %v456
        %v458 = vcombine.high %v450, %v450
        %v459 = vcombine.high %v457, %v457
        %v596 = vunpack.c.l.b16 %v289
        %v597 = vunpack.c.l.b16 %v290
        %v598 = vunpack.c.l.b16 %v291
        %v599 = vunpack.c.l.b16 %v292
        %v600 = vunpack.c.l.b16 %v293
        %v601 = vunpack.c.l.b16 %v294
        %v602 = vunpack.c.l.b16 %v295
        %v603 = vunpack.c.l.b16 %v296
        %v604 = vunpack.c.l.b16 %v297
        %v605 = vunpack.c.l.b16 %v298
        %v606 = vunpack.c.l.b16 %v299
        %v607 = vunpack.c.l.b16 %v300
        %v608 = vunpack.c.l.b16 %v301
        %v609 = vunpack.c.l.b16 %v302
        %v610 = vunpack.c.l.b16 %v303
        %v611 = vunpack.c.l.b16 %v304
        %v612 = vunpack.c.l.b16 %v305
        %v613 = vunpack.c.l.b16 %v306
        %v614 = vunpack.c.l.b16 %v307
        %v615 = vunpack.c.l.b16 %v308
        %v616 = vunpack.c.l.b16 %v309
        %v617 = vunpack.c.l.b16 %v310
        %v618 = vunpack.c.l.b16 %v311
        %v619 = vunpack.c.l.b16 %v312
        %v620 = vunpack.c.l.b16 %v313
        %v621 = vunpack.c.l.b16 %v314
        %v622 = vunpack.c.l.b16 %v315
        %v623 = vunpack.c.l.b16 %v316
        %v624 = vunpack.c.l.b16 %v317
        %v625 = vunpack.c.l.b16 %v318
        %v626 = vunpack.c.l.b16 %v319
        %v627 = vunpack.c.l.b16 %v320
        %v628 = vunpack.c.l.b16 %v321
        %v629 = vunpack.c.l.b16 %v322
        %v630 = vunpack.c.l.b16 %v323
        %v631 = vunpack.c.l.b16 %v324
        %v632 = vunpack.c.l.b16 %v325
        %v633 = vunpack.c.l.b16 %v326
        %v634 = vunpack.c.l.b16 %v327
        %v635 = vunpack.c.l.b16 %v328
        %v636 = vunpack.c.l.b16 %v329
        %v637 = vunpack.c.l.b16 %v330
        %v638 = vunpack.c.l.b16 %v331
        %v639 = vunpack.c.l.b16 %v332
        %v640 = vunpack.c.l.b16 %v333
        %v641 = vunpack.c.l.b16 %v334
        %v642 = vunpack.c.l.b16 %v335
        %v643 = vunpack.c.l.b16 %v336
        %v644 = vunpack.c.l.b16 %v337
        %v645 = vunpack.c.l.b16 %v338
        %v646 = vunpack.c.l.b16 %v339
        %v647 = vunpack.c.l.b16 %v340
        %v648 = vunpack.c.l.b16 %v341
        %v649 = vunpack.c.l.b16 %v342
        %v650 = vunpack.c.l.b16 %v343
        %v651 = vunpack.c.l.b16 %v344
        %v652 = vunpack.c.l.b16 %v345
        %v653 = vunpack.c.l.b16 %v346
        %v654 = vunpack.c.l.b16 %v347
        %v655 = vunpack.c.l.b16 %v348
        %v656 = vunpack.c.l.b16 %v349
        %v657 = vunpack.c.l.b16 %v350
        %v658 = vunpack.c.l.b16 %v351
        %v659 = vunpack.c.l.b16 %v352
        %v660 = vunpack.c.l.b16 %v353
        %v661 = vunpack.c.l.b16 %v354
        %v662 = vunpack.c.l.b16 %v355
        %v663 = vunpack.c.l.b16 %v356
        %v664 = vunpack.c.l.b16 %v357
        %v665 = vunpack.c.l.b16 %v358
        %v666 = vunpack.c.l.b16 %v359
        %v667 = vunpack.c.l.b16 %v360
        %v668 = vunpack.c.l.b16 %v361
        %v669 = vunpack.c.l.b16 %v362
        %v670 = vunpack.c.l.b16 %v363
        %v671 = vunpack.c.l.b16 %v364
        %v672 = vunpack.c.l.b16 %v365
        %v673 = vunpack.c.l.b16 %v366
        %v674 = vunpack.c.l.b16 %v367
        %v675 = vunpack.c.l.b16 %v368
        %v676 = vunpack.c.l.b16 %v369
        %v677 = vunpack.c.l.b16 %v370
        %v678 = vunpack.c.l.b16 %v371
        %v679 = vunpack.c.l.b16 %v372
        %v680 = vunpack.c.l.b16 %v373
        %v681 = vunpack.c.l.b16 %v374
        %v682 = vunpack.c.l.b16 %v375
        %v683 = vunpack.c.l.b16 %v376
        %v684 = vunpack.c.l.b16 %v377
        %v685 = vunpack.c.l.b16 %v378
        %v686 = vunpack.c.l.b16 %v379
        %v687 = vunpack.c.l.b16 %v380
        %v688 = vunpack.c.l.b16 %v381
        %v689 = vunpack.c.l.b16 %v382
        %v690 = vunpack.c.l.b16 %v383
        %v691 = vunpack.c.l.b16 %v384
        %v692 = vunpack.c.l.b16 %v385
        %v693 = vunpack.c.l.b16 %v386
        %v694 = vunpack.c.l.b16 %v387
        %v695 = vunpack.c.l.b16 %v388
        %v696 = vunpack.c.l.b16 %v389
        %v697 = vunpack.c.l.b16 %v390
        %v698 = vunpack.c.l.b16 %v391
        %v699 = vunpack.c.l.b16 %v392
        %v700 = vunpack.c.l.b16 %v393
        %v701 = vunpack.c.l.b16 %v394
        %v702 = vunpack.c.l.b16 %v395
        %v703 = vunpack.c.l.b16 %v396
        %v704 = vunpack.c.l.b16 %v397
        %v705 = vunpack.c.l.b16 %v398
        %v706 = vunpack.c.l.b16 %v399
        %v707 = vunpack.c.l.b16 %v400
        %v708 = vunpack.c.l.b16 %v401
        %v709 = vunpack.c.l.b16 %v402
        %v710 = vunpack.c.l.b16 %v403
        %v711 = vunpack.c.l.b16 %v404
        %v712 = vunpack.c.l.b16 %v405
        %v713 = vunpack.c.l.b16 %v406
        %v714 = vunpack.c.l.b16 %v407
        %v715 = vunpack.c.l.b16 %v408
        %v716 = vunpack.c.l.b16 %v409
        %v717 = vunpack.c.l.b16 %v410
        %v718 = vunpack.c.l.b16 %v411
        %v719 = vunpack.c.l.b16 %v412
        %v720 = vunpack.c.l.b16 %v413
        %v721 = vunpack.c.l.b16 %v414
        %v722 = vunpack.c.l.b16 %v415
        %v723 = vunpack.c.l.b16 %v416
        %v724 = vpack.c.b16 %v597, %v596
        %v725 = vpack.c.b16 %v599, %v598
        %v726 = vpack.c.b16 %v601, %v600
        %v727 = vpack.c.b16 %v603, %v602
        %v728 = vpack.c.b16 %v605, %v604
        %v729 = vpack.c.b16 %v607, %v606
        %v730 = vpack.c.b16 %v609, %v608
        %v731 = vpack.c.b16 %v611, %v610
        %v732 = vpack.c.b16 %v613, %v612
        %v733 = vpack.c.b16 %v615, %v614
        %v734 = vpack.c.b16 %v617, %v616
        %v735 = vpack.c.b16 %v619, %v618
        %v736 = vpack.c.b16 %v621, %v620
        %v737 = vpack.c.b16 %v623, %v622
        %v738 = vpack.c.b16 %v625, %v624
        %v739 = vpack.c.b16 %v627, %v626
        %v740 = vpack.c.b16 %v629, %v628
        %v741 = vpack.c.b16 %v631, %v630
        %v742 = vpack.c.b16 %v633, %v632
        %v743 = vpack.c.b16 %v635, %v634
        %v744 = vpack.c.b16 %v637, %v636
        %v745 = vpack.c.b16 %v639, %v638
        %v746 = vpack.c.b16 %v641, %v640
        %v747 = vpack.c.b16 %v643, %v642
        %v748 = vpack.c.b16 %v645, %v644
        %v749 = vpack.c.b16 %v647, %v646
        %v750 = vpack.c.b16 %v649, %v648
        %v751 = vpack.c.b16 %v651, %v650
        %v752 = vpack.c.b16 %v653, %v652
        %v753 = vpack.c.b16 %v655, %v654
        %v754 = vpack.c.b16 %v657, %v656
        %v755 = vpack.c.b16 %v659, %v658
        %v756 = vpack.c.b16 %v661, %v660
        %v757 = vpack.c.b16 %v663, %v662
        %v758 = vpack.c.b16 %v665, %v664
        %v759 = vpack.c.b16 %v667, %v666
        %v760 = vpack.c.b16 %v669, %v668
        %v761 = vpack.c.b16 %v671, %v670
        %v762 = vpack.c.b16 %v673, %v672
        %v763 = vpack.c.b16 %v675, %v674
        %v764 = vpack.c.b16 %v677, %v676
        %v765 = vpack.c.b16 %v679, %v678
        %v766 = vpack.c.b16 %v681, %v680
        %v767 = vpack.c.b16 %v683, %v682
        %v768 = vpack.c.b16 %v685, %v684
        %v769 = vpack.c.b16 %v687, %v686
        %v770 = vpack.c.b16 %v689, %v688
        %v771 = vpack.c.b16 %v691, %v690
        %v772 = vpack.c.b16 %v693, %v692
        %v773 = vpack.c.b16 %v695, %v694
        %v774 = vpack.c.b16 %v697, %v696
        %v775 = vpack.c.b16 %v699, %v698
        %v776 = vpack.c.b16 %v701, %v700
        %v777 = vpack.c.b16 %v703, %v702
        %v778 = vpack.c.b16 %v705, %v704
        %v779 = vpack.c.b16 %v707, %v706
        %v780 = vpack.c.b16 %v709, %v708
        %v781 = vpack.c.b16 %v711, %v710
        %v782 = vpack.c.b16 %v713, %v712
        %v783 = vpack.c.b16 %v715, %v714
        %v784 = vpack.c.b16 %v717, %v716
        %v785 = vpack.c.b16 %v719, %v718
        %v786 = vpack.c.b16 %v721, %v720
        %v787 = vpack.c.b16 %v723, %v722
        %852 = vmatprep.subr.bf16.mxu0 0
        %853 = vmatpush1.bf16.msra.mxu0 %v724
        %854 = vmatprep.subr.bf16.mxu0 0
        %855 = vmatpush1.bf16.msra.mxu0 %v725
        %856 = vmatprep.subr.bf16.mxu0 0
        %857 = vmatpush1.bf16.msra.mxu0 %v726
        %858 = vmatprep.subr.bf16.mxu0 0
        %859 = vmatpush1.bf16.msra.mxu0 %v727
        %860 = vmatprep.subr.bf16.mxu0 0
        %861 = vmatpush1.bf16.msra.mxu0 %v728
        %862 = vmatprep.subr.bf16.mxu0 0
        %863 = vmatpush1.bf16.msra.mxu0 %v729
        %864 = vmatprep.subr.bf16.mxu0 0
        %865 = vmatpush1.bf16.msra.mxu0 %v730
        %866 = vmatprep.subr.bf16.mxu0 0
        %867 = vmatpush1.bf16.msra.mxu0 %v731
        %868 = vmatprep.subr.bf16.mxu0 0
        %869 = vmatpush1.bf16.msra.mxu0 %v732
        %870 = vmatprep.subr.bf16.mxu0 0
        %871 = vmatpush1.bf16.msra.mxu0 %v733
        %872 = vmatprep.subr.bf16.mxu0 0
        %873 = vmatpush1.bf16.msra.mxu0 %v734
        %874 = vmatprep.subr.bf16.mxu0 0
        %875 = vmatpush1.bf16.msra.mxu0 %v735
        %876 = vmatprep.subr.bf16.mxu0 0
        %877 = vmatpush1.bf16.msra.mxu0 %v736
        %878 = vmatprep.subr.bf16.mxu0 0
        %879 = vmatpush1.bf16.msra.mxu0 %v737
        %880 = vmatprep.subr.bf16.mxu0 0
        %881 = vmatpush1.bf16.msra.mxu0 %v738
        %882 = vmatprep.subr.bf16.mxu0 0
        %883 = vmatpush1.bf16.msra.mxu0 %v739
        %884 = vmatprep.mubr.bf16.mxu0 %v441
        %885 = vmatmul.mubr.bf16.gmra.mrb[0].mxu0 %v433
        %v886 = vpop.f32.mrb[0].mxu0
        %v887 = vadd.f32 %v422, %v886
        %v888 = vpop.f32.mrb[0].mxu0
        %v889 = vpop.f32.mrb[0].mxu0
        %v890 = vpop.f32.mrb[0].mxu0
        %891 = vdwg.mxu0
        %892 = vmatprep.subr.bf16.mxu0 0
        %893 = vmatpush1.bf16.msra.mxu0 %v740
        %894 = vmatprep.subr.bf16.mxu0 0
        %895 = vmatpush1.bf16.msra.mxu0 %v741
        %896 = vmatprep.subr.bf16.mxu0 0
        %897 = vmatpush1.bf16.msra.mxu0 %v742
        %898 = vmatprep.subr.bf16.mxu0 0
        %899 = vmatpush1.bf16.msra.mxu0 %v743
        %900 = vmatprep.subr.bf16.mxu0 0
        %901 = vmatpush1.bf16.msra.mxu0 %v744
        %902 = vmatprep.subr.bf16.mxu0 0
        %903 = vmatpush1.bf16.msra.mxu0 %v745
        %904 = vmatprep.subr.bf16.mxu0 0
        %905 = vmatpush1.bf16.msra.mxu0 %v746
        %906 = vmatprep.subr.bf16.mxu0 0
        %907 = vmatpush1.bf16.msra.mxu0 %v747
        %908 = vmatprep.subr.bf16.mxu0 0
        %909 = vmatpush1.bf16.msra.mxu0 %v748
        %910 = vmatprep.subr.bf16.mxu0 0
        %911 = vmatpush1.bf16.msra.mxu0 %v749
        %912 = vmatprep.subr.bf16.mxu0 0
        %913 = vmatpush1.bf16.msra.mxu0 %v750
        %914 = vmatprep.subr.bf16.mxu0 0
        %915 = vmatpush1.bf16.msra.mxu0 %v751
        %916 = vmatprep.subr.bf16.mxu0 0
        %917 = vmatpush1.bf16.msra.mxu0 %v752
        %918 = vmatprep.subr.bf16.mxu0 0
        %919 = vmatpush1.bf16.msra.mxu0 %v753
        %920 = vmatprep.subr.bf16.mxu0 0
        %921 = vmatpush1.bf16.msra.mxu0 %v754
        %922 = vmatprep.subr.bf16.mxu0 0
        %923 = vmatpush1.bf16.msra.mxu0 %v755
        %924 = vmatprep.mubr.bf16.mxu0 %v442
        %925 = vmatmul.mubr.bf16.gmra.mrb[0].mxu0 %v440
        %v926 = vpop.f32.mrb[0].mxu0
        %v927 = vadd.f32 %v887, %v926
        %v928 = vpop.f32.mrb[0].mxu0
        %v929 = vpop.f32.mrb[0].mxu0
        %v930 = vpop.f32.mrb[0].mxu0
        %931 = vdwg.mxu0
        %932 = vmatprep.subr.bf16.mxu0 0
        %933 = vmatpush1.bf16.msra.mxu0 %v756
        %934 = vmatprep.subr.bf16.mxu0 0
        %935 = vmatpush1.bf16.msra.mxu0 %v757
        %936 = vmatprep.subr.bf16.mxu0 0
        %937 = vmatpush1.bf16.msra.mxu0 %v758
        %938 = vmatprep.subr.bf16.mxu0 0
        %939 = vmatpush1.bf16.msra.mxu0 %v759
        %940 = vmatprep.subr.bf16.mxu0 0
        %941 = vmatpush1.bf16.msra.mxu0 %v760
        %942 = vmatprep.subr.bf16.mxu0 0
        %943 = vmatpush1.bf16.msra.mxu0 %v761
        %944 = vmatprep.subr.bf16.mxu0 0
        %945 = vmatpush1.bf16.msra.mxu0 %v762
        %946 = vmatprep.subr.bf16.mxu0 0
        %947 = vmatpush1.bf16.msra.mxu0 %v763
        %948 = vmatprep.subr.bf16.mxu0 0
        %949 = vmatpush1.bf16.msra.mxu0 %v764
        %950 = vmatprep.subr.bf16.mxu0 0
        %951 = vmatpush1.bf16.msra.mxu0 %v765
        %952 = vmatprep.subr.bf16.mxu0 0
        %953 = vmatpush1.bf16.msra.mxu0 %v766
        %954 = vmatprep.subr.bf16.mxu0 0
        %955 = vmatpush1.bf16.msra.mxu0 %v767
        %956 = vmatprep.subr.bf16.mxu0 0
        %957 = vmatpush1.bf16.msra.mxu0 %v768
        %958 = vmatprep.subr.bf16.mxu0 0
        %959 = vmatpush1.bf16.msra.mxu0 %v769
        %960 = vmatprep.subr.bf16.mxu0 0
        %961 = vmatpush1.bf16.msra.mxu0 %v770
        %962 = vmatprep.subr.bf16.mxu0 0
        %963 = vmatpush1.bf16.msra.mxu0 %v771
        %964 = vmatprep.mubr.bf16.mxu0 %v458
        %965 = vmatmul.mubr.bf16.gmra.mrb[0].mxu0 %v450
        %v966 = vpop.f32.mrb[0].mxu0
        %v967 = vadd.f32 %v927, %v966
        %v968 = vpop.f32.mrb[0].mxu0
        %v969 = vpop.f32.mrb[0].mxu0
        %v970 = vpop.f32.mrb[0].mxu0
        %971 = vdwg.mxu0
        %972 = vmatprep.subr.bf16.mxu0 0
        %973 = vmatpush1.bf16.msra.mxu0 %v772
        %974 = vmatprep.subr.bf16.mxu0 0
        %975 = vmatpush1.bf16.msra.mxu0 %v773
        %976 = vmatprep.subr.bf16.mxu0 0
        %977 = vmatpush1.bf16.msra.mxu0 %v774
        %978 = vmatprep.subr.bf16.mxu0 0
        %979 = vmatpush1.bf16.msra.mxu0 %v775
        %980 = vmatprep.subr.bf16.mxu0 0
        %981 = vmatpush1.bf16.msra.mxu0 %v776
        %982 = vmatprep.subr.bf16.mxu0 0
        %983 = vmatpush1.bf16.msra.mxu0 %v777
        %984 = vmatprep.subr.bf16.mxu0 0
        %985 = vmatpush1.bf16.msra.mxu0 %v778
        %986 = vmatprep.subr.bf16.mxu0 0
        %987 = vmatpush1.bf16.msra.mxu0 %v779
        %988 = vmatprep.subr.bf16.mxu0 0
        %989 = vmatpush1.bf16.msra.mxu0 %v780
        %990 = vmatprep.subr.bf16.mxu0 0
        %991 = vmatpush1.bf16.msra.mxu0 %v781
        %992 = vmatprep.subr.bf16.mxu0 0
        %993 = vmatpush1.bf16.msra.mxu0 %v782
        %994 = vmatprep.subr.bf16.mxu0 0
        %995 = vmatpush1.bf16.msra.mxu0 %v783
        %996 = vmatprep.subr.bf16.mxu0 0
        %997 = vmatpush1.bf16.msra.mxu0 %v784
        %998 = vmatprep.subr.bf16.mxu0 0
        %999 = vmatpush1.bf16.msra.mxu0 %v785
        %1000 = vmatprep.subr.bf16.mxu0 0
        %1001 = vmatpush1.bf16.msra.mxu0 %v786
        %1002 = vmatprep.subr.bf16.mxu0 0
        %1003 = vmatpush1.bf16.msra.mxu0 %v787
        %1004 = vmatprep.mubr.bf16.mxu0 %v459
        %1005 = vmatmul.mubr.bf16.gmra.mrb[0].mxu0 %v457
        %v1006 = vpop.f32.mrb[0].mxu0
        %v1007 = vadd.f32 %v967, %v1006
        %v1008 = vpop.f32.mrb[0].mxu0
        %v1009 = vpop.f32.mrb[0].mxu0
        %v1010 = vpop.f32.mrb[0].mxu0
        %1011 = vdwg.mxu0
        %vm1012 = vcmp.gt.f32.partialorder %v1007, 0.0
        %v1013 = vmul.f32 %v1007, 0.2
        %v1014 = vsel %vm1012, %v1007, %v1013
        %vm1015 = vcmask 1043456
        %v1016 = vsel %vm1015, %v1014, -inf
        %v1017 = vrot.slane %v1016, 4
        %v1018 = vmax.f32 %v1016, %v1017
        %v1019 = vrot.slane %v1018, 2
        %v1020 = vmax.f32 %v1018, %v1019
        %v1021 = vrot.slane %v1020, 1
        %v1022 = vmax.f32 %v1020, %v1021
        %p1023 = scmp.eq.s32.totalorder %s28, 0
        // Predicated region
        $region41: #{s4gan_discriminator_forward.7} parent=39 // pred_check
          %p1024 = pneg %p1023
        $region42: #{s4gan_discriminator_forward.7} parent=39 // pred_check_branch
          %1026 = sbr.rel (%p1024) target = $region44
        $region43: #{s4gan_discriminator_forward.7} parent=39 // pred_region
          %1027 = vst [vmem:[%s268] sm:$0x1] %v1022
        $region44: #{s4gan_discriminator_forward.7} parent=39 // pred_fallthru
          _
        %p1028 = scmp.gt.s32.totalorder %s28, 0
        // Predicated region
        $region45: #{s4gan_discriminator_forward.7} parent=39 // pred_check
          %p1029 = pneg %p1028
        $region46: #{s4gan_discriminator_forward.7} parent=39 // pred_check_branch
          %1031 = sbr.rel (%p1029) target = $region48
        $region47: #{s4gan_discriminator_forward.7} parent=39 // pred_region
          %v1032 = vld [vmem:[%s268] sm:$0x1]
          %v1033 = vmax.f32 %v1032, %v1022
          %1034 = vst [vmem:[%s268] sm:$0x1] %v1033
        $region48: #{s4gan_discriminator_forward.7} parent=39 // pred_fallthru
          _
        // Predicated region
        $region49: #{s4gan_discriminator_forward.7} parent=39 // pred_check
          %p1035 = pneg %p1023
        $region50: #{s4gan_discriminator_forward.7} parent=39 // pred_check_branch
          %1037 = sbr.rel (%p1035) target = $region52
        $region51: #{s4gan_discriminator_forward.7} parent=39 // pred_region
          %v1038 = vld [vmem:[%s268] sm:$0x1]
          %v1039 = vld [vmem:[%s3] sm:$0x1]
          %v1040 = vmul.f32 %v1038, %v1039
          %vm1041 = vcmask 1040384
          %v1042 = vsel %vm1041, %v1040, 0.0
          %1043 = vadd.xlane.f32.xlu0 %v1042
          %v1044 = vpop.xlane.xlu0 %1043
          %v1045 = vld [vmem:[#allocation2] sm:$0x1]
          %v1046 = vadd.f32 %v1044, %v1045
          %v1047 = vxor.u32 %v1046, 2147483648
          %v1048 = vmul.f32 %v1047, 1.442695
          %v1049 = vpow.pop %v1048
          %v1050 = vadd.f32 %v1049, 1.0
          %v1051 = vrcp.pop %v1050
          %v1052 = vmul.f32 1.0, %v1051
          %vm1053 = vcmask 0
          %1054 = vst.msk [vmem:[%s285] sm:$0x1] %vm1053, %v1052
        $region52: #{s4gan_discriminator_forward.7} parent=39 // pred_fallthru
          _
        %s1055 = sand.u32 %s155, 1
        %s1056 = scalar_lea.sflag [#allocation4], %s1055
        %s1057 = sand.u32 %s155, 1
        %s1058 = scalar_lea.vmem [#allocation3], %s1057
        %p1059 = scmp.lt.s32.totalorder %s27, 1
        %s1060 = scalar_select %p1059, %s27, 1
        %s1061 = scalar_lea.vmem %s6, %s1060
        // Predicated region
        $region53: #{s4gan_discriminator_forward.7} parent=39 // pred_check
          %p1062 = pneg %p165
        $region54: #{s4gan_discriminator_forward.7} parent=39 // pred_check_branch
          %1064 = sbr.rel (%p1062) target = $region56
        $region55: #{s4gan_discriminator_forward.7} parent=39 // pred_region
          %s1066 = ssub.s32 16, 16
          %1067 = vsyncadd %s1056, %s1066
          %s1068 = smul.addr %s27, 16
          %s1069 = scalar_lea.hbm %s5, %s1068
          %s1071 = sshll.u32 %s1058, 4
          %s1072 = int_to_ptr.vmem [resolvable:$true] %s1071
          %1074 = dma.vmem_to_hbm [thread:$0]  %s1072, 16, %s1069, %s1056
        $region56: #{s4gan_discriminator_forward.7} parent=39 // pred_fallthru
          _
        // Predicated region
        $region57: #{s4gan_discriminator_forward.7} parent=39 // pred_check
          %p1075 = pneg %p191
        $region58: #{s4gan_discriminator_forward.7} parent=39 // pred_check_branch
          %1077 = sbr.rel (%p1075) target = $region60
        $region59: #{s4gan_discriminator_forward.7} parent=39 // pred_region
          _
        $region60: #{s4gan_discriminator_forward.7} parent=39 // pred_fallthru
          _
      $region40: #{s4gan_discriminator_forward.7} parent=5 // pred_fallthru
        _
      %p1078 = scmp.le.s32.totalorder 2, %s18
      // Predicated region
      $region61: #{s4gan_discriminator_forward.7} parent=5 // pred_check
        %p1079 = pneg %p1078
      $region62: #{s4gan_discriminator_forward.7} parent=5 // pred_check_branch
        %1081 = sbr.rel (%p1079) target = $region64
      $region63: #{s4gan_discriminator_forward.7} parent=5 // pred_region
        %s1082 = ssub.s32 %s18, 2
        // Predicated region
        $region65: #{s4gan_discriminator_forward.7} parent=63 // pred_check
          %p1083 = pneg %p171
        $region66: #{s4gan_discriminator_forward.7} parent=63 // pred_check_branch
          %1085 = sbr.rel (%p1083) target = $region68
        $region67: #{s4gan_discriminator_forward.7} parent=63 // pred_region
          %s1086 = sand.u32 %s156, 1
          %s1087 = scalar_lea.sflag [#allocation4], %s1086
          %s1088 = sand.u32 %s156, 1
          %s1089 = scalar_lea.vmem [#allocation3], %s1088
          %1090 = dma.done %s1087, 16
        $region68: #{s4gan_discriminator_forward.7} parent=63 // pred_fallthru
          _
        // Predicated region
        $region69: #{s4gan_discriminator_forward.7} parent=63 // pred_check
          %p1091 = pneg %p197
        $region70: #{s4gan_discriminator_forward.7} parent=63 // pred_check_branch
          %1093 = sbr.rel (%p1091) target = $region72
        $region71: #{s4gan_discriminator_forward.7} parent=63 // pred_region
          %p1094 = scmp.lt.s32.totalorder %s29, 1
          %s1095 = scalar_select %p1094, %s29, 1
          %s1096 = scalar_lea.vmem %s6, %s1095
        $region72: #{s4gan_discriminator_forward.7} parent=63 // pred_fallthru
          _
      $region64: #{s4gan_discriminator_forward.7} parent=5 // pred_fallthru
        _
    $region6: #{s4gan_discriminator_forward.7} parent=1 // loop_footer
      %s22 = sadd.s32 1, %s18
    $region7: #{s4gan_discriminator_forward.7} parent=1 // loop_footer_branch
      %17 = sbr.rel target = $region3
    $region8: #{s4gan_discriminator_forward.7} parent=1 // loop_exit
      _
    %1097 = vsyncpa [#allocation4], 1
    %s1098 = scalar_lea.sflag [#allocation4], 1
    %1099 = vsyncpa %s1098, 1

</llo_original>
